<compile_context>
chip_gen: v5e
topology: v5e:2x2
jax: 0.10.0
libtpu: 0.0.40
codegen_flags: <defaults>
</compile_context>

<pallas_src>
import functools

import jax
import jax.numpy as jnp
from jax.experimental import pallas as pl
from jax.experimental.pallas import tpu as pltpu

LN_EPS = 1e-5          # torch.nn.LayerNorm default
LANE = 128             # TPU lane width
COMPUTE_DTYPE = jnp.bfloat16


def _round_up(x, m):
    return (x + m - 1) // m * m


def _ln_relu_block(h, w_ref, b_ref, g_ref, beta_ref):
    """Linear (bf16 MXU, f32 acc) -> LayerNorm (f32) -> ReLU."""
    z = jnp.dot(h.astype(w_ref.dtype), w_ref[...],
                preferred_element_type=jnp.float32) + b_ref[...]
    mu = jnp.mean(z, axis=-1, keepdims=True)
    zc = z - mu                                        # reused for var AND norm
    var = jnp.mean(zc * zc, axis=-1, keepdims=True)    # biased var (torch LN)
    zn = zc * jax.lax.rsqrt(var + LN_EPS)
    return jnp.maximum(zn * g_ref[...] + beta_ref[...], 0.0)


def forward_model_kernel(
    obs_ref, act_ref,                       # [TB, latent], [TB, action]   (f32)
    w_obs_ref, w_act_ref, b_in_ref,         # input_fc, split along inputs
    w0_ref, b0_ref, g0_ref, be0_ref,        # fcs[0] + layer_norms[0]
    w1_ref, b1_ref, g1_ref, be1_ref,        # fcs[1] + layer_norms[1]
    w_out_ref, b_out_ref,                   # output_fc (lane-padded out dim)
    o_ref,                                  # [TB, out_pad]  (bf16)
):
    obs = obs_ref[...].astype(w_obs_ref.dtype)
    act = act_ref[...].astype(w_act_ref.dtype)

    # x = ReLU(input_fc([obs, act]))  -- concat replaced by two MXU dots.
    h = (jnp.dot(obs, w_obs_ref[...], preferred_element_type=jnp.float32)
         + jnp.dot(act, w_act_ref[...], preferred_element_type=jnp.float32)
         + b_in_ref[...])
    h = jnp.maximum(h, 0.0)

    # two blocks: ReLU(LayerNorm(fc(h)))
    h = _ln_relu_block(h, w0_ref, b0_ref, g0_ref, be0_ref)
    h = _ln_relu_block(h, w1_ref, b1_ref, g1_ref, be1_ref)

    # output_fc(h) -- lane-dense (padded) bf16 store.
    out = (jnp.dot(h.astype(w_out_ref.dtype), w_out_ref[...],
                   preferred_element_type=jnp.float32) + b_out_ref[...])
    o_ref[...] = out.astype(o_ref.dtype)


def prepare_params(params):
    """One-time conversion (outside the per-call path): bf16 MXU operands and
    lane-padded output weights.  Returns (prepared_params, out_dim)."""
    out_dim = params["w_out"].shape[1]
    out_pad = _round_up(out_dim, LANE)
    w_out = params["w_out"].astype(COMPUTE_DTYPE)
    b_out = params["b_out"]
    if out_pad != out_dim:
        w_out = jnp.pad(w_out, ((0, 0), (0, out_pad - out_dim)))
        b_out = jnp.pad(b_out, ((0, 0), (0, out_pad - out_dim)))
    prepped = dict(
        w_obs=params["w_obs"].astype(COMPUTE_DTYPE),
        w_act=params["w_act"].astype(COMPUTE_DTYPE),
        b_in=params["b_in"],
        w0=params["w0"].astype(COMPUTE_DTYPE), b0=params["b0"],
        g0=params["g0"], be0=params["be0"],
        w1=params["w1"].astype(COMPUTE_DTYPE), b1=params["b1"],
        g1=params["g1"], be1=params["be1"],
        w_out=w_out, b_out=b_out,
    )
    return prepped, out_dim


@functools.partial(jax.jit, static_argnames=("out_dim", "tile_b"))
def forward_model(obs, action, params, *, out_dim, tile_b=512):
    """obs: [B, latent_dim], action: [B, action_shape] -> [B, out_dim] (f32).

    `params` must come from prepare_params() (bf16 weights, padded output)."""
    batch, latent_dim = obs.shape
    action_dim = action.shape[1]
    hidden = params["w0"].shape[0]
    out_pad = params["w_out"].shape[1]

    # --- batch tiling: large tile (amortize per-grid-step overhead), but keep
    #     >= 2 programs when possible so v7x's 2 TensorCores both get work. ---
    tb = min(tile_b, _round_up(batch, 8))
    if batch > 8 and _round_up(batch, tb) // tb < 2:
        tb = _round_up(-(-batch // 2), 8)
    b_pad = _round_up(batch, tb)
    grid = (b_pad // tb,)

    def _pad_rows(x):
        if b_pad == batch:
            return x
        return jnp.pad(x, ((0, b_pad - batch), (0, 0)))

    obs_p = _pad_rows(obs)
    act_p = _pad_rows(action)

    weight_args = (
        params["w_obs"], params["w_act"], params["b_in"],
        params["w0"], params["b0"], params["g0"], params["be0"],
        params["w1"], params["b1"], params["g1"], params["be1"],
        params["w_out"], params["b_out"],
    )

    def _resident(a):
        # Constant block index -> stays in VMEM; single-buffered (no benefit to
        # double-buffering an operand that never changes).
        return pl.BlockSpec(a.shape, lambda i: (0, 0),
                            pipeline_mode=pl.Buffered(1))

    in_specs = (
        [pl.BlockSpec((tb, latent_dim), lambda i: (i, 0)),
         pl.BlockSpec((tb, action_dim), lambda i: (i, 0))]
        + [_resident(a) for a in weight_args]
    )
    out_spec = pl.BlockSpec((tb, out_pad), lambda i: (i, 0))

    # --- VMEM budget: single-buffered weights + double-buffered streams ---
    resident_bytes = sum(a.size * a.dtype.itemsize for a in weight_args)
    stream_bytes = 2 * tb * ((latent_dim + action_dim) * 4 + out_pad * 2)
    vmem_needed = resident_bytes + stream_bytes
    vmem_limit = None
    if vmem_needed > 30 * 1024 * 1024:     # exceeds default scoped limit
        try:
            cap = int(pltpu.get_tpu_info().vmem_capacity_bytes)
        except Exception:                  # conservative (v7x has 64 MiB/TC)
            cap = 64 * 1024 * 1024
        vmem_limit = min(int(vmem_needed * 1.25), int(cap * 0.8))

    flops = 2 * b_pad * (latent_dim * hidden + action_dim * hidden
                         + 2 * hidden * hidden + hidden * out_pad)
    bytes_accessed = (b_pad * (latent_dim + action_dim) * 4
                      + b_pad * out_pad * 2 + resident_bytes)
    cost = pl.CostEstimate(flops=flops, transcendentals=2 * b_pad,
                           bytes_accessed=bytes_accessed)

    out = pl.pallas_call(
        forward_model_kernel,
        out_shape=jax.ShapeDtypeStruct((b_pad, out_pad), COMPUTE_DTYPE),
        grid=grid,
        in_specs=in_specs,
        out_specs=out_spec,
        compiler_params=pltpu.CompilerParams(
            dimension_semantics=("parallel",),
            vmem_limit_bytes=vmem_limit,
        ),
        cost_estimate=cost,
    )(obs_p, act_p, *weight_args)

    return out[:batch, :out_dim].astype(jnp.float32)


def init_params(key, latent_dim, hidden_dim, action_shape):
    """Deterministic parameter init mirroring MLPModel._init_weights (f32)."""
    input_dim = latent_dim + action_shape
    k_in_w, k_in_b, k0, k1, k_out = jax.random.split(key, 5)

    # input_fc: torch default Linear init (U[-1/sqrt(fan_in), 1/sqrt(fan_in)])
    bound = 1.0 / float(input_dim) ** 0.5
    w_in = jax.random.uniform(k_in_w, (input_dim, hidden_dim), jnp.float32, -bound, bound)
    b_in = jax.random.uniform(k_in_b, (1, hidden_dim), jnp.float32, -bound, bound)

    # hidden fcs: orthogonal with ReLU gain sqrt(2), zero bias
    ortho_relu = jax.nn.initializers.orthogonal(scale=2.0 ** 0.5)
    w0 = ortho_relu(k0, (hidden_dim, hidden_dim), jnp.float32)
    w1 = ortho_relu(k1, (hidden_dim, hidden_dim), jnp.float32)
    b0 = jnp.zeros((1, hidden_dim), jnp.float32)
    b1 = jnp.zeros((1, hidden_dim), jnp.float32)

    # layer norms: gamma=1, beta=0
    g0 = jnp.ones((1, hidden_dim), jnp.float32)
    be0 = jnp.zeros((1, hidden_dim), jnp.float32)
    g1 = jnp.ones((1, hidden_dim), jnp.float32)
    be1 = jnp.zeros((1, hidden_dim), jnp.float32)

    # output_fc: orthogonal gain 1.0, zero bias
    ortho_lin = jax.nn.initializers.orthogonal(scale=1.0)
    w_out = ortho_lin(k_out, (hidden_dim, latent_dim), jnp.float32)
    b_out = jnp.zeros((1, latent_dim), jnp.float32)

    return dict(
        w_obs=w_in[:latent_dim], w_act=w_in[latent_dim:], b_in=b_in,
        w0=w0, b0=b0, g0=g0, be0=be0,
        w1=w1, b1=b1, g1=g1, be1=be1,
        w_out=w_out, b_out=b_out,
    )


def forward_model_ref(obs, action, p):
    """Pure-JAX reference (same bf16-operand / f32-accumulate matmul recipe)."""
    def mm(x, w):
        return jnp.dot(x.astype(COMPUTE_DTYPE), w.astype(COMPUTE_DTYPE),
                       preferred_element_type=jnp.float32)

    h = jnp.maximum(mm(obs, p["w_obs"]) + mm(action, p["w_act"]) + p["b_in"], 0.0)
    for w, b, g, be in ((p["w0"], p["b0"], p["g0"], p["be0"]),
                        (p["w1"], p["b1"], p["g1"], p["be1"])):
        z = mm(h, w) + b
        mu = jnp.mean(z, axis=-1, keepdims=True)
        var = jnp.mean(jnp.square(z - mu), axis=-1, keepdims=True)
        h = jnp.maximum((z - mu) * jax.lax.rsqrt(var + LN_EPS) * g + be, 0.0)
    return mm(h, p["w_out"]) + p["b_out"]


if __name__ == "__main__":
    # Small, lane-friendly shapes: hidden_dim is a free hyper-parameter so we
    # pick a 128-multiple; batch=256 gives a 2-program grid (exercises
    # pipelining and the "parallel" axis for v7x's 2 TensorCores).
    latent_dim, hidden_dim, action_shape = 16, 128, 4
    batch = 256

    key = jax.random.PRNGKey(0)
    k_obs, k_act, k_params = jax.random.split(key, 3)

    obs = jax.random.normal(k_obs, (batch, latent_dim), jnp.float32)
    action = jax.random.normal(k_act, (batch, action_shape), jnp.float32)
    params = init_params(k_params, latent_dim, hidden_dim, action_shape)

    # One-time weight conversion (bf16 + lane padding) outside the call path.
    prepped, out_dim = prepare_params(params)

    out = forward_model(obs, action, prepped, out_dim=out_dim)
    out = jax.block_until_ready(out)

    ref = forward_model_ref(obs, action, params)
    assert out.shape == (batch, latent_dim)
    assert bool(jnp.allclose(out, ref, atol=1e-2, rtol=1e-2)), "mismatch vs reference"

    print("KERNEL_OK")
</pallas_src>

<mosaic_0001>
module attributes {stable_mosaic.version = 11 : i64} {
  func.func @forward_model_kernel(%arg0: i32, %arg1: memref<128x16xf32, #tpu.memory_space<vmem>>, %arg2: memref<128x4xf32, #tpu.memory_space<vmem>>, %arg3: memref<16x128xbf16, #tpu.memory_space<vmem>>, %arg4: memref<4x128xbf16, #tpu.memory_space<vmem>>, %arg5: memref<1x128xf32, #tpu.memory_space<vmem>>, %arg6: memref<128x128xbf16, #tpu.memory_space<vmem>>, %arg7: memref<1x128xf32, #tpu.memory_space<vmem>>, %arg8: memref<1x128xf32, #tpu.memory_space<vmem>>, %arg9: memref<1x128xf32, #tpu.memory_space<vmem>>, %arg10: memref<128x128xbf16, #tpu.memory_space<vmem>>, %arg11: memref<1x128xf32, #tpu.memory_space<vmem>>, %arg12: memref<1x128xf32, #tpu.memory_space<vmem>>, %arg13: memref<1x128xf32, #tpu.memory_space<vmem>>, %arg14: memref<128x128xbf16, #tpu.memory_space<vmem>>, %arg15: memref<1x128xf32, #tpu.memory_space<vmem>>, %arg16: memref<128x128xbf16, #tpu.memory_space<vmem>>) attributes {dimension_semantics = [#tpu.dimension_semantics<parallel>], iteration_bounds = array<i64: 2>, scalar_prefetch = 0 : i64, scratch_operands = 0 : i64, tpu.core_type = #tpu.core_type<tc>, window_params = [{transform_indices = @transform_0, window_bounds = array<i64: 128, 16>}, {transform_indices = @transform_1, window_bounds = array<i64: 128, 4>}, {pipeline_mode = #tpu.pipeline_mode<synchronous>, transform_indices = @transform_2, window_bounds = array<i64: 16, 128>}, {pipeline_mode = #tpu.pipeline_mode<synchronous>, transform_indices = @transform_3, window_bounds = array<i64: 4, 128>}, {pipeline_mode = #tpu.pipeline_mode<synchronous>, transform_indices = @transform_4, window_bounds = array<i64: 1, 128>}, {pipeline_mode = #tpu.pipeline_mode<synchronous>, transform_indices = @transform_5, window_bounds = array<i64: 128, 128>}, {pipeline_mode = #tpu.pipeline_mode<synchronous>, transform_indices = @transform_6, window_bounds = array<i64: 1, 128>}, {pipeline_mode = #tpu.pipeline_mode<synchronous>, transform_indices = @transform_7, window_bounds = array<i64: 1, 128>}, {pipeline_mode = #tpu.pipeline_mode<synchronous>, transform_indices = @transform_8, window_bounds = array<i64: 1, 128>}, {pipeline_mode = #tpu.pipeline_mode<synchronous>, transform_indices = @transform_9, window_bounds = array<i64: 128, 128>}, {pipeline_mode = #tpu.pipeline_mode<synchronous>, transform_indices = @transform_10, window_bounds = array<i64: 1, 128>}, {pipeline_mode = #tpu.pipeline_mode<synchronous>, transform_indices = @transform_11, window_bounds = array<i64: 1, 128>}, {pipeline_mode = #tpu.pipeline_mode<synchronous>, transform_indices = @transform_12, window_bounds = array<i64: 1, 128>}, {pipeline_mode = #tpu.pipeline_mode<synchronous>, transform_indices = @transform_13, window_bounds = array<i64: 128, 128>}, {pipeline_mode = #tpu.pipeline_mode<synchronous>, transform_indices = @transform_14, window_bounds = array<i64: 1, 128>}, {transform_indices = @transform_15, window_bounds = array<i64: 128, 128>}]} {
    %c0 = arith.constant 0 : index
    %c0_0 = arith.constant 0 : index
    %0 = vector.load %arg1[%c0, %c0_0] : memref<128x16xf32, #tpu.memory_space<vmem>>, vector<128x16xf32>
    %1 = arith.truncf %0 : vector<128x16xf32> to vector<128x16xbf16>
    %c0_1 = arith.constant 0 : index
    %c0_2 = arith.constant 0 : index
    %2 = vector.load %arg2[%c0_1, %c0_2] : memref<128x4xf32, #tpu.memory_space<vmem>>, vector<128x4xf32>
    %3 = arith.truncf %2 : vector<128x4xf32> to vector<128x4xbf16>
    %c0_3 = arith.constant 0 : index
    %c0_4 = arith.constant 0 : index
    %4 = vector.load %arg3[%c0_3, %c0_4] : memref<16x128xbf16, #tpu.memory_space<vmem>>, vector<16x128xbf16>
    %cst = arith.constant dense<0.000000e+00> : vector<128x128xf32>
    %5 = tpu.matmul %1, %4, %cst {dimension_numbers = #tpu.dot_dimension_numbers<[1], [0], [0], [1], [0, 0, 1, 1], [], []>} : vector<128x16xbf16>, vector<16x128xbf16>, vector<128x128xf32> -> vector<128x128xf32>
    %c0_5 = arith.constant 0 : index
    %c0_6 = arith.constant 0 : index
    %6 = vector.load %arg4[%c0_5, %c0_6] : memref<4x128xbf16, #tpu.memory_space<vmem>>, vector<4x128xbf16>
    %cst_7 = arith.constant dense<0.000000e+00> : vector<128x128xf32>
    %7 = tpu.matmul %3, %6, %cst_7 {dimension_numbers = #tpu.dot_dimension_numbers<[1], [0], [0], [1], [0, 0, 1, 1], [], []>} : vector<128x4xbf16>, vector<4x128xbf16>, vector<128x128xf32> -> vector<128x128xf32>
    %8 = arith.addf %5, %7 : vector<128x128xf32>
    %c0_8 = arith.constant 0 : index
    %c0_9 = arith.constant 0 : index
    %9 = vector.load %arg5[%c0_8, %c0_9] : memref<1x128xf32, #tpu.memory_space<vmem>>, vector<1x128xf32>
    %10 = vector.broadcast %9 : vector<1x128xf32> to vector<128x128xf32>
    %11 = arith.addf %8, %10 : vector<128x128xf32>
    %cst_10 = arith.constant 0.000000e+00 : f32
    %12 = vector.broadcast %cst_10 : f32 to vector<128x128xf32>
    %13 = arith.maximumf %11, %12 : vector<128x128xf32>
    %14 = arith.truncf %13 : vector<128x128xf32> to vector<128x128xbf16>
    %c0_11 = arith.constant 0 : index
    %c0_12 = arith.constant 0 : index
    %15 = vector.load %arg6[%c0_11, %c0_12] : memref<128x128xbf16, #tpu.memory_space<vmem>>, vector<128x128xbf16>
    %cst_13 = arith.constant dense<0.000000e+00> : vector<128x128xf32>
    %16 = tpu.matmul %14, %15, %cst_13 {dimension_numbers = #tpu.dot_dimension_numbers<[1], [0], [0], [1], [0, 0, 1, 1], [], []>} : vector<128x128xbf16>, vector<128x128xbf16>, vector<128x128xf32> -> vector<128x128xf32>
    %c0_14 = arith.constant 0 : index
    %c0_15 = arith.constant 0 : index
    %17 = vector.load %arg7[%c0_14, %c0_15] : memref<1x128xf32, #tpu.memory_space<vmem>>, vector<1x128xf32>
    %18 = vector.broadcast %17 : vector<1x128xf32> to vector<128x128xf32>
    %19 = arith.addf %16, %18 : vector<128x128xf32>
    %cst_16 = arith.constant dense<0.000000e+00> : vector<128xf32>
    %20 = vector.multi_reduction <add>, %19, %cst_16 [1] : vector<128x128xf32> to vector<128xf32>
    %21 = vector.shape_cast %20 : vector<128xf32> to vector<128x1xf32>
    %cst_17 = arith.constant 1.280000e+02 : f32
    %22 = vector.broadcast %cst_17 : f32 to vector<128x1xf32>
    %23 = arith.divf %21, %22 : vector<128x1xf32>
    %24 = vector.broadcast %23 : vector<128x1xf32> to vector<128x128xf32>
    %25 = arith.subf %19, %24 : vector<128x128xf32>
    %26 = arith.mulf %25, %25 : vector<128x128xf32>
    %cst_18 = arith.constant dense<0.000000e+00> : vector<128xf32>
    %27 = vector.multi_reduction <add>, %26, %cst_18 [1] : vector<128x128xf32> to vector<128xf32>
    %28 = vector.shape_cast %27 : vector<128xf32> to vector<128x1xf32>
    %cst_19 = arith.constant 1.280000e+02 : f32
    %29 = vector.broadcast %cst_19 : f32 to vector<128x1xf32>
    %30 = arith.divf %28, %29 : vector<128x1xf32>
    %cst_20 = arith.constant 9.99999974E-6 : f32
    %31 = vector.broadcast %cst_20 : f32 to vector<128x1xf32>
    %32 = arith.addf %30, %31 : vector<128x1xf32>
    %33 = math.rsqrt %32 : vector<128x1xf32>
    %34 = vector.broadcast %33 : vector<128x1xf32> to vector<128x128xf32>
    %35 = arith.mulf %25, %34 : vector<128x128xf32>
    %c0_21 = arith.constant 0 : index
    %c0_22 = arith.constant 0 : index
    %36 = vector.load %arg8[%c0_21, %c0_22] : memref<1x128xf32, #tpu.memory_space<vmem>>, vector<1x128xf32>
    %37 = vector.broadcast %36 : vector<1x128xf32> to vector<128x128xf32>
    %38 = arith.mulf %35, %37 : vector<128x128xf32>
    %c0_23 = arith.constant 0 : index
    %c0_24 = arith.constant 0 : index
    %39 = vector.load %arg9[%c0_23, %c0_24] : memref<1x128xf32, #tpu.memory_space<vmem>>, vector<1x128xf32>
    %40 = vector.broadcast %39 : vector<1x128xf32> to vector<128x128xf32>
    %41 = arith.addf %38, %40 : vector<128x128xf32>
    %cst_25 = arith.constant 0.000000e+00 : f32
    %42 = vector.broadcast %cst_25 : f32 to vector<128x128xf32>
    %43 = arith.maximumf %41, %42 : vector<128x128xf32>
    %44 = arith.truncf %43 : vector<128x128xf32> to vector<128x128xbf16>
    %c0_26 = arith.constant 0 : index
    %c0_27 = arith.constant 0 : index
    %45 = vector.load %arg10[%c0_26, %c0_27] : memref<128x128xbf16, #tpu.memory_space<vmem>>, vector<128x128xbf16>
    %cst_28 = arith.constant dense<0.000000e+00> : vector<128x128xf32>
    %46 = tpu.matmul %44, %45, %cst_28 {dimension_numbers = #tpu.dot_dimension_numbers<[1], [0], [0], [1], [0, 0, 1, 1], [], []>} : vector<128x128xbf16>, vector<128x128xbf16>, vector<128x128xf32> -> vector<128x128xf32>
    %c0_29 = arith.constant 0 : index
    %c0_30 = arith.constant 0 : index
    %47 = vector.load %arg11[%c0_29, %c0_30] : memref<1x128xf32, #tpu.memory_space<vmem>>, vector<1x128xf32>
    %48 = vector.broadcast %47 : vector<1x128xf32> to vector<128x128xf32>
    %49 = arith.addf %46, %48 : vector<128x128xf32>
    %cst_31 = arith.constant dense<0.000000e+00> : vector<128xf32>
    %50 = vector.multi_reduction <add>, %49, %cst_31 [1] : vector<128x128xf32> to vector<128xf32>
    %51 = vector.shape_cast %50 : vector<128xf32> to vector<128x1xf32>
    %cst_32 = arith.constant 1.280000e+02 : f32
    %52 = vector.broadcast %cst_32 : f32 to vector<128x1xf32>
    %53 = arith.divf %51, %52 : vector<128x1xf32>
    %54 = vector.broadcast %53 : vector<128x1xf32> to vector<128x128xf32>
    %55 = arith.subf %49, %54 : vector<128x128xf32>
    %56 = arith.mulf %55, %55 : vector<128x128xf32>
    %cst_33 = arith.constant dense<0.000000e+00> : vector<128xf32>
    %57 = vector.multi_reduction <add>, %56, %cst_33 [1] : vector<128x128xf32> to vector<128xf32>
    %58 = vector.shape_cast %57 : vector<128xf32> to vector<128x1xf32>
    %cst_34 = arith.constant 1.280000e+02 : f32
    %59 = vector.broadcast %cst_34 : f32 to vector<128x1xf32>
    %60 = arith.divf %58, %59 : vector<128x1xf32>
    %cst_35 = arith.constant 9.99999974E-6 : f32
    %61 = vector.broadcast %cst_35 : f32 to vector<128x1xf32>
    %62 = arith.addf %60, %61 : vector<128x1xf32>
    %63 = math.rsqrt %62 : vector<128x1xf32>
    %64 = vector.broadcast %63 : vector<128x1xf32> to vector<128x128xf32>
    %65 = arith.mulf %55, %64 : vector<128x128xf32>
    %c0_36 = arith.constant 0 : index
    %c0_37 = arith.constant 0 : index
    %66 = vector.load %arg12[%c0_36, %c0_37] : memref<1x128xf32, #tpu.memory_space<vmem>>, vector<1x128xf32>
    %67 = vector.broadcast %66 : vector<1x128xf32> to vector<128x128xf32>
    %68 = arith.mulf %65, %67 : vector<128x128xf32>
    %c0_38 = arith.constant 0 : index
    %c0_39 = arith.constant 0 : index
    %69 = vector.load %arg13[%c0_38, %c0_39] : memref<1x128xf32, #tpu.memory_space<vmem>>, vector<1x128xf32>
    %70 = vector.broadcast %69 : vector<1x128xf32> to vector<128x128xf32>
    %71 = arith.addf %68, %70 : vector<128x128xf32>
    %cst_40 = arith.constant 0.000000e+00 : f32
    %72 = vector.broadcast %cst_40 : f32 to vector<128x128xf32>
    %73 = arith.maximumf %71, %72 : vector<128x128xf32>
    %74 = arith.truncf %73 : vector<128x128xf32> to vector<128x128xbf16>
    %c0_41 = arith.constant 0 : index
    %c0_42 = arith.constant 0 : index
    %75 = vector.load %arg14[%c0_41, %c0_42] : memref<128x128xbf16, #tpu.memory_space<vmem>>, vector<128x128xbf16>
    %cst_43 = arith.constant dense<0.000000e+00> : vector<128x128xf32>
    %76 = tpu.matmul %74, %75, %cst_43 {dimension_numbers = #tpu.dot_dimension_numbers<[1], [0], [0], [1], [0, 0, 1, 1], [], []>} : vector<128x128xbf16>, vector<128x128xbf16>, vector<128x128xf32> -> vector<128x128xf32>
    %c0_44 = arith.constant 0 : index
    %c0_45 = arith.constant 0 : index
    %77 = vector.load %arg15[%c0_44, %c0_45] : memref<1x128xf32, #tpu.memory_space<vmem>>, vector<1x128xf32>
    %78 = vector.broadcast %77 : vector<1x128xf32> to vector<128x128xf32>
    %79 = arith.addf %76, %78 : vector<128x128xf32>
    %80 = arith.truncf %79 : vector<128x128xf32> to vector<128x128xbf16>
    %c0_46 = arith.constant 0 : index
    %c0_47 = arith.constant 0 : index
    %81 = vector.load %arg16[%c0_46, %c0_47] : memref<128x128xbf16, #tpu.memory_space<vmem>>, vector<128x128xbf16>
    tpu.vector_store %arg16[%c0_46, %c0_47], %80 {strides = array<i32>} : memref<128x128xbf16, #tpu.memory_space<vmem>>, vector<128x128xbf16>,
    return
  }
  func.func @transform_0(%arg0: i32) -> (i32, i32) {
    %c0_i32 = arith.constant 0 : i32
    %c0_i32_0 = arith.constant 0 : i32
    return %arg0, %c0_i32 : i32, i32
  }
  func.func @transform_1(%arg0: i32) -> (i32, i32) {
    %c0_i32 = arith.constant 0 : i32
    %c0_i32_0 = arith.constant 0 : i32
    return %arg0, %c0_i32 : i32, i32
  }
  func.func @transform_2(%arg0: i32) -> (i32, i32) {
    %c0_i32 = arith.constant 0 : i32
    %c0_i32_0 = arith.constant 0 : i32
    %c0_i32_1 = arith.constant 0 : i32
    return %c0_i32, %c0_i32_0 : i32, i32
  }
  func.func @transform_3(%arg0: i32) -> (i32, i32) {
    %c0_i32 = arith.constant 0 : i32
    %c0_i32_0 = arith.constant 0 : i32
    %c0_i32_1 = arith.constant 0 : i32
    return %c0_i32, %c0_i32_0 : i32, i32
  }
  func.func @transform_4(%arg0: i32) -> (i32, i32) {
    %c0_i32 = arith.constant 0 : i32
    %c0_i32_0 = arith.constant 0 : i32
    %c0_i32_1 = arith.constant 0 : i32
    return %c0_i32, %c0_i32_0 : i32, i32
  }
  func.func @transform_5(%arg0: i32) -> (i32, i32) {
    %c0_i32 = arith.constant 0 : i32
    %c0_i32_0 = arith.constant 0 : i32
    %c0_i32_1 = arith.constant 0 : i32
    return %c0_i32, %c0_i32_0 : i32, i32
  }
  func.func @transform_6(%arg0: i32) -> (i32, i32) {
    %c0_i32 = arith.constant 0 : i32
    %c0_i32_0 = arith.constant 0 : i32
    %c0_i32_1 = arith.constant 0 : i32
    return %c0_i32, %c0_i32_0 : i32, i32
  }
  func.func @transform_7(%arg0: i32) -> (i32, i32) {
    %c0_i32 = arith.constant 0 : i32
    %c0_i32_0 = arith.constant 0 : i32
    %c0_i32_1 = arith.constant 0 : i32
    return %c0_i32, %c0_i32_0 : i32, i32
  }
  func.func @transform_8(%arg0: i32) -> (i32, i32) {
    %c0_i32 = arith.constant 0 : i32
    %c0_i32_0 = arith.constant 0 : i32
    %c0_i32_1 = arith.constant 0 : i32
    return %c0_i32, %c0_i32_0 : i32, i32
  }
  func.func @transform_9(%arg0: i32) -> (i32, i32) {
    %c0_i32 = arith.constant 0 : i32
    %c0_i32_0 = arith.constant 0 : i32
    %c0_i32_1 = arith.constant 0 : i32
    return %c0_i32, %c0_i32_0 : i32, i32
  }
  func.func @transform_10(%arg0: i32) -> (i32, i32) {
    %c0_i32 = arith.constant 0 : i32
    %c0_i32_0 = arith.constant 0 : i32
    %c0_i32_1 = arith.constant 0 : i32
    return %c0_i32, %c0_i32_0 : i32, i32
  }
  func.func @transform_11(%arg0: i32) -> (i32, i32) {
    %c0_i32 = arith.constant 0 : i32
    %c0_i32_0 = arith.constant 0 : i32
    %c0_i32_1 = arith.constant 0 : i32
    return %c0_i32, %c0_i32_0 : i32, i32
  }
  func.func @transform_12(%arg0: i32) -> (i32, i32) {
    %c0_i32 = arith.constant 0 : i32
    %c0_i32_0 = arith.constant 0 : i32
    %c0_i32_1 = arith.constant 0 : i32
    return %c0_i32, %c0_i32_0 : i32, i32
  }
  func.func @transform_13(%arg0: i32) -> (i32, i32) {
    %c0_i32 = arith.constant 0 : i32
    %c0_i32_0 = arith.constant 0 : i32
    %c0_i32_1 = arith.constant 0 : i32
    return %c0_i32, %c0_i32_0 : i32, i32
  }
  func.func @transform_14(%arg0: i32) -> (i32, i32) {
    %c0_i32 = arith.constant 0 : i32
    %c0_i32_0 = arith.constant 0 : i32
    %c0_i32_1 = arith.constant 0 : i32
    return %c0_i32, %c0_i32_0 : i32, i32
  }
  func.func @transform_15(%arg0: i32) -> (i32, i32) {
    %c0_i32 = arith.constant 0 : i32
    %c0_i32_0 = arith.constant 0 : i32
    return %arg0, %c0_i32 : i32, i32
  }
}

</mosaic_0001>

<llo_original>
// kernel: forward_model.1
$region0: #{forward_model.1}
  #allocation0 [shape = 'u32[]', space=smem, size = 0x4, offset = 0x4, fixed_abs, tag = 'smem constant byte address 0x4 - core index']
  #allocation1 [shape = 'u32[72,128]{1,0:T(1,128)}', space=vmem, size = 0x9000, scoped, tag = 'internal scratch']
  %s0 = inlined_call_operand.vmem [shape: f32[256,16], index: 0, kind: input, shape index: {}]
  %s1 = inlined_call_operand.vmem [shape: f32[256,4], index: 1, kind: input, shape index: {}]
  %s2 = inlined_call_operand.vmem [shape: bf16[16,128], index: 2, kind: input, shape index: {}]
  %s3 = inlined_call_operand.vmem [shape: bf16[4,128], index: 3, kind: input, shape index: {}]
  %s4 = inlined_call_operand.vmem [shape: f32[1,128], index: 4, kind: input, shape index: {}]
  %s5 = inlined_call_operand.vmem [shape: bf16[128,128], index: 5, kind: input, shape index: {}]
  %s6 = inlined_call_operand.vmem [shape: f32[1,128], index: 6, kind: input, shape index: {}]
  %s7 = inlined_call_operand.vmem [shape: f32[1,128], index: 7, kind: input, shape index: {}]
  %s8 = inlined_call_operand.vmem [shape: f32[1,128], index: 8, kind: input, shape index: {}]
  %s9 = inlined_call_operand.vmem [shape: bf16[128,128], index: 9, kind: input, shape index: {}]
  %s10 = inlined_call_operand.vmem [shape: f32[1,128], index: 10, kind: input, shape index: {}]
  %s11 = inlined_call_operand.vmem [shape: f32[1,128], index: 11, kind: input, shape index: {}]
  %s12 = inlined_call_operand.vmem [shape: f32[1,128], index: 12, kind: input, shape index: {}]
  %s13 = inlined_call_operand.vmem [shape: bf16[128,128], index: 13, kind: input, shape index: {}]
  %s14 = inlined_call_operand.vmem [shape: f32[1,128], index: 14, kind: input, shape index: {}]
  %s15 = inlined_call_operand.vmem [shape: bf16[256,128], index: 15, kind: output, shape index: {}]
  %s16 = sld [smem:[#allocation0]]
  $region93: #{forward_model.1} parent=0
    _
  %s18 = ssub.s32 1, %s16
  %s19 = scalar_select 0, %s18, %s16
  loop: start=0, step=1, limit=4
  $region2: #{forward_model.1} parent=0 // loop_pre_header
    _
  $region3: #{forward_model.1} parent=0 // loop_header
    %s21 = sphi 0, %s25
    %p22 = scmp.ge.s32.totalorder %s21, 4
    %s31 = sphi 0, %s33
    %s34 = sphi 0, %s31
    %s35 = sphi 0, %s34
    %s51 = sphi 0, %s35
    %s57 = sphi 0, %s59
    %s60 = sphi 0, %s57
    %s61 = sphi 0, %s60
    %s77 = sphi 0, %s61
    %s81 = sphi 0, %s81
    %s83 = sphi 0, %s81
    %s84 = sphi 0, %s83
    %s98 = sphi 0, %s84
    %s102 = sphi 0, %s102
    %s104 = sphi 0, %s102
    %s105 = sphi 0, %s104
    %s119 = sphi 0, %s105
    %s123 = sphi 0, %s123
    %s125 = sphi 0, %s123
    %s126 = sphi 0, %s125
    %s140 = sphi 0, %s126
    %s144 = sphi 0, %s144
    %s146 = sphi 0, %s144
    %s147 = sphi 0, %s146
    %s161 = sphi 0, %s147
    %s165 = sphi 0, %s165
    %s167 = sphi 0, %s165
    %s168 = sphi 0, %s167
    %s182 = sphi 0, %s168
    %s186 = sphi 0, %s186
    %s188 = sphi 0, %s186
    %s189 = sphi 0, %s188
    %s203 = sphi 0, %s189
    %s207 = sphi 0, %s207
    %s209 = sphi 0, %s207
    %s210 = sphi 0, %s209
    %s224 = sphi 0, %s210
    %s228 = sphi 0, %s228
    %s230 = sphi 0, %s228
    %s231 = sphi 0, %s230
    %s245 = sphi 0, %s231
    %s249 = sphi 0, %s249
    %s251 = sphi 0, %s249
    %s252 = sphi 0, %s251
    %s266 = sphi 0, %s252
    %s270 = sphi 0, %s270
    %s272 = sphi 0, %s270
    %s273 = sphi 0, %s272
    %s287 = sphi 0, %s273
    %s291 = sphi 0, %s291
    %s293 = sphi 0, %s291
    %s294 = sphi 0, %s293
    %s308 = sphi 0, %s294
    %s312 = sphi 0, %s312
    %s314 = sphi 0, %s312
    %s315 = sphi 0, %s314
    %s329 = sphi 0, %s315
    %s333 = sphi 0, %s333
    %s335 = sphi 0, %s333
    %s336 = sphi 0, %s335
    %s350 = sphi 0, %s336
    %s356 = sphi 0, %s358
    %s359 = sphi 0, %s356
    %s360 = sphi 0, %s359
    %s376 = sphi 0, %s360
  $region4: #{forward_model.1} parent=0 // loop_header_branch
    %24 = sbr.rel (%p22) target = $region8
  $region5: #{forward_model.1} parent=0 // loop_body
    %s26 = ssub.s32 %s21, 1
    %s27 = ssub.s32 %s21, 2
    %s28 = sadd.s32 %s21, 1
    %s29 = ssub.s32 %s21, %s28
    %p30 = scmp.eq.s32.totalorder %s29, 0
    %s32 = sadd.s32 %s31, 1
    %s33 = scalar_select %p30, %s31, %s32
    %p36 = pneg %p30
    %p37 = scmp.eq.s32.totalorder %s21, 1
    %p38 = por %p36, %p37
    %p39 = scmp.ne.s32.totalorder %s31, %s34
    %p40 = scmp.eq.s32.totalorder %s21, 0
    %p41 = por %p39, %p40
    %p42 = scmp.ne.s32.totalorder %s31, %s34
    %p43 = scmp.eq.s32.totalorder %s26, 1
    %p44 = por %p42, %p43
    %p45 = scmp.ne.s32.totalorder %s34, %s35
    %p46 = scmp.eq.s32.totalorder %s26, 0
    %p47 = por %p45, %p46
    %p48 = scmp.ne.s32.totalorder %s34, %s35
    %p49 = scmp.eq.s32.totalorder %s27, 1
    %p50 = por %p48, %p49
    %p52 = scmp.ne.s32.totalorder %s35, %s51
    %p53 = scmp.eq.s32.totalorder %s27, 0
    %p54 = por %p52, %p53
    %s55 = ssub.s32 %s21, %s28
    %p56 = scmp.eq.s32.totalorder %s55, 0
    %s58 = sadd.s32 %s57, 1
    %s59 = scalar_select %p56, %s57, %s58
    %p62 = pneg %p56
    %p63 = scmp.eq.s32.totalorder %s21, 1
    %p64 = por %p62, %p63
    %p65 = scmp.ne.s32.totalorder %s57, %s60
    %p66 = scmp.eq.s32.totalorder %s21, 0
    %p67 = por %p65, %p66
    %p68 = scmp.ne.s32.totalorder %s57, %s60
    %p69 = scmp.eq.s32.totalorder %s26, 1
    %p70 = por %p68, %p69
    %p71 = scmp.ne.s32.totalorder %s60, %s61
    %p72 = scmp.eq.s32.totalorder %s26, 0
    %p73 = por %p71, %p72
    %p74 = scmp.ne.s32.totalorder %s60, %s61
    %p75 = scmp.eq.s32.totalorder %s27, 1
    %p76 = por %p74, %p75
    %p78 = scmp.ne.s32.totalorder %s61, %s77
    %p79 = scmp.eq.s32.totalorder %s27, 0
    %p80 = por %p78, %p79
    %s82 = sadd.s32 %s81, 1
    %p85 = scmp.eq.s32.totalorder %s21, 1
    %p86 = scmp.ne.s32.totalorder %s81, %s83
    %p87 = scmp.eq.s32.totalorder %s21, 0
    %p88 = por %p86, %p87
    %p89 = scmp.ne.s32.totalorder %s81, %s83
    %p90 = scmp.eq.s32.totalorder %s26, 1
    %p91 = por %p89, %p90
    %p92 = scmp.ne.s32.totalorder %s83, %s84
    %p93 = scmp.eq.s32.totalorder %s26, 0
    %p94 = por %p92, %p93
    %p95 = scmp.ne.s32.totalorder %s83, %s84
    %p96 = scmp.eq.s32.totalorder %s27, 1
    %p97 = por %p95, %p96
    %p99 = scmp.ne.s32.totalorder %s84, %s98
    %p100 = scmp.eq.s32.totalorder %s27, 0
    %p101 = por %p99, %p100
    %s103 = sadd.s32 %s102, 1
    %p106 = scmp.eq.s32.totalorder %s21, 1
    %p107 = scmp.ne.s32.totalorder %s102, %s104
    %p108 = scmp.eq.s32.totalorder %s21, 0
    %p109 = por %p107, %p108
    %p110 = scmp.ne.s32.totalorder %s102, %s104
    %p111 = scmp.eq.s32.totalorder %s26, 1
    %p112 = por %p110, %p111
    %p113 = scmp.ne.s32.totalorder %s104, %s105
    %p114 = scmp.eq.s32.totalorder %s26, 0
    %p115 = por %p113, %p114
    %p116 = scmp.ne.s32.totalorder %s104, %s105
    %p117 = scmp.eq.s32.totalorder %s27, 1
    %p118 = por %p116, %p117
    %p120 = scmp.ne.s32.totalorder %s105, %s119
    %p121 = scmp.eq.s32.totalorder %s27, 0
    %p122 = por %p120, %p121
    %s124 = sadd.s32 %s123, 1
    %p127 = scmp.eq.s32.totalorder %s21, 1
    %p128 = scmp.ne.s32.totalorder %s123, %s125
    %p129 = scmp.eq.s32.totalorder %s21, 0
    %p130 = por %p128, %p129
    %p131 = scmp.ne.s32.totalorder %s123, %s125
    %p132 = scmp.eq.s32.totalorder %s26, 1
    %p133 = por %p131, %p132
    %p134 = scmp.ne.s32.totalorder %s125, %s126
    %p135 = scmp.eq.s32.totalorder %s26, 0
    %p136 = por %p134, %p135
    %p137 = scmp.ne.s32.totalorder %s125, %s126
    %p138 = scmp.eq.s32.totalorder %s27, 1
    %p139 = por %p137, %p138
    %p141 = scmp.ne.s32.totalorder %s126, %s140
    %p142 = scmp.eq.s32.totalorder %s27, 0
    %p143 = por %p141, %p142
    %s145 = sadd.s32 %s144, 1
    %p148 = scmp.eq.s32.totalorder %s21, 1
    %p149 = scmp.ne.s32.totalorder %s144, %s146
    %p150 = scmp.eq.s32.totalorder %s21, 0
    %p151 = por %p149, %p150
    %p152 = scmp.ne.s32.totalorder %s144, %s146
    %p153 = scmp.eq.s32.totalorder %s26, 1
    %p154 = por %p152, %p153
    %p155 = scmp.ne.s32.totalorder %s146, %s147
    %p156 = scmp.eq.s32.totalorder %s26, 0
    %p157 = por %p155, %p156
    %p158 = scmp.ne.s32.totalorder %s146, %s147
    %p159 = scmp.eq.s32.totalorder %s27, 1
    %p160 = por %p158, %p159
    %p162 = scmp.ne.s32.totalorder %s147, %s161
    %p163 = scmp.eq.s32.totalorder %s27, 0
    %p164 = por %p162, %p163
    %s166 = sadd.s32 %s165, 1
    %p169 = scmp.eq.s32.totalorder %s21, 1
    %p170 = scmp.ne.s32.totalorder %s165, %s167
    %p171 = scmp.eq.s32.totalorder %s21, 0
    %p172 = por %p170, %p171
    %p173 = scmp.ne.s32.totalorder %s165, %s167
    %p174 = scmp.eq.s32.totalorder %s26, 1
    %p175 = por %p173, %p174
    %p176 = scmp.ne.s32.totalorder %s167, %s168
    %p177 = scmp.eq.s32.totalorder %s26, 0
    %p178 = por %p176, %p177
    %p179 = scmp.ne.s32.totalorder %s167, %s168
    %p180 = scmp.eq.s32.totalorder %s27, 1
    %p181 = por %p179, %p180
    %p183 = scmp.ne.s32.totalorder %s168, %s182
    %p184 = scmp.eq.s32.totalorder %s27, 0
    %p185 = por %p183, %p184
    %s187 = sadd.s32 %s186, 1
    %p190 = scmp.eq.s32.totalorder %s21, 1
    %p191 = scmp.ne.s32.totalorder %s186, %s188
    %p192 = scmp.eq.s32.totalorder %s21, 0
    %p193 = por %p191, %p192
    %p194 = scmp.ne.s32.totalorder %s186, %s188
    %p195 = scmp.eq.s32.totalorder %s26, 1
    %p196 = por %p194, %p195
    %p197 = scmp.ne.s32.totalorder %s188, %s189
    %p198 = scmp.eq.s32.totalorder %s26, 0
    %p199 = por %p197, %p198
    %p200 = scmp.ne.s32.totalorder %s188, %s189
    %p201 = scmp.eq.s32.totalorder %s27, 1
    %p202 = por %p200, %p201
    %p204 = scmp.ne.s32.totalorder %s189, %s203
    %p205 = scmp.eq.s32.totalorder %s27, 0
    %p206 = por %p204, %p205
    %s208 = sadd.s32 %s207, 1
    %p211 = scmp.eq.s32.totalorder %s21, 1
    %p212 = scmp.ne.s32.totalorder %s207, %s209
    %p213 = scmp.eq.s32.totalorder %s21, 0
    %p214 = por %p212, %p213
    %p215 = scmp.ne.s32.totalorder %s207, %s209
    %p216 = scmp.eq.s32.totalorder %s26, 1
    %p217 = por %p215, %p216
    %p218 = scmp.ne.s32.totalorder %s209, %s210
    %p219 = scmp.eq.s32.totalorder %s26, 0
    %p220 = por %p218, %p219
    %p221 = scmp.ne.s32.totalorder %s209, %s210
    %p222 = scmp.eq.s32.totalorder %s27, 1
    %p223 = por %p221, %p222
    %p225 = scmp.ne.s32.totalorder %s210, %s224
    %p226 = scmp.eq.s32.totalorder %s27, 0
    %p227 = por %p225, %p226
    %s229 = sadd.s32 %s228, 1
    %p232 = scmp.eq.s32.totalorder %s21, 1
    %p233 = scmp.ne.s32.totalorder %s228, %s230
    %p234 = scmp.eq.s32.totalorder %s21, 0
    %p235 = por %p233, %p234
    %p236 = scmp.ne.s32.totalorder %s228, %s230
    %p237 = scmp.eq.s32.totalorder %s26, 1
    %p238 = por %p236, %p237
    %p239 = scmp.ne.s32.totalorder %s230, %s231
    %p240 = scmp.eq.s32.totalorder %s26, 0
    %p241 = por %p239, %p240
    %p242 = scmp.ne.s32.totalorder %s230, %s231
    %p243 = scmp.eq.s32.totalorder %s27, 1
    %p244 = por %p242, %p243
    %p246 = scmp.ne.s32.totalorder %s231, %s245
    %p247 = scmp.eq.s32.totalorder %s27, 0
    %p248 = por %p246, %p247
    %s250 = sadd.s32 %s249, 1
    %p253 = scmp.eq.s32.totalorder %s21, 1
    %p254 = scmp.ne.s32.totalorder %s249, %s251
    %p255 = scmp.eq.s32.totalorder %s21, 0
    %p256 = por %p254, %p255
    %p257 = scmp.ne.s32.totalorder %s249, %s251
    %p258 = scmp.eq.s32.totalorder %s26, 1
    %p259 = por %p257, %p258
    %p260 = scmp.ne.s32.totalorder %s251, %s252
    %p261 = scmp.eq.s32.totalorder %s26, 0
    %p262 = por %p260, %p261
    %p263 = scmp.ne.s32.totalorder %s251, %s252
    %p264 = scmp.eq.s32.totalorder %s27, 1
    %p265 = por %p263, %p264
    %p267 = scmp.ne.s32.totalorder %s252, %s266
    %p268 = scmp.eq.s32.totalorder %s27, 0
    %p269 = por %p267, %p268
    %s271 = sadd.s32 %s270, 1
    %p274 = scmp.eq.s32.totalorder %s21, 1
    %p275 = scmp.ne.s32.totalorder %s270, %s272
    %p276 = scmp.eq.s32.totalorder %s21, 0
    %p277 = por %p275, %p276
    %p278 = scmp.ne.s32.totalorder %s270, %s272
    %p279 = scmp.eq.s32.totalorder %s26, 1
    %p280 = por %p278, %p279
    %p281 = scmp.ne.s32.totalorder %s272, %s273
    %p282 = scmp.eq.s32.totalorder %s26, 0
    %p283 = por %p281, %p282
    %p284 = scmp.ne.s32.totalorder %s272, %s273
    %p285 = scmp.eq.s32.totalorder %s27, 1
    %p286 = por %p284, %p285
    %p288 = scmp.ne.s32.totalorder %s273, %s287
    %p289 = scmp.eq.s32.totalorder %s27, 0
    %p290 = por %p288, %p289
    %s292 = sadd.s32 %s291, 1
    %p295 = scmp.eq.s32.totalorder %s21, 1
    %p296 = scmp.ne.s32.totalorder %s291, %s293
    %p297 = scmp.eq.s32.totalorder %s21, 0
    %p298 = por %p296, %p297
    %p299 = scmp.ne.s32.totalorder %s291, %s293
    %p300 = scmp.eq.s32.totalorder %s26, 1
    %p301 = por %p299, %p300
    %p302 = scmp.ne.s32.totalorder %s293, %s294
    %p303 = scmp.eq.s32.totalorder %s26, 0
    %p304 = por %p302, %p303
    %p305 = scmp.ne.s32.totalorder %s293, %s294
    %p306 = scmp.eq.s32.totalorder %s27, 1
    %p307 = por %p305, %p306
    %p309 = scmp.ne.s32.totalorder %s294, %s308
    %p310 = scmp.eq.s32.totalorder %s27, 0
    %p311 = por %p309, %p310
    %s313 = sadd.s32 %s312, 1
    %p316 = scmp.eq.s32.totalorder %s21, 1
    %p317 = scmp.ne.s32.totalorder %s312, %s314
    %p318 = scmp.eq.s32.totalorder %s21, 0
    %p319 = por %p317, %p318
    %p320 = scmp.ne.s32.totalorder %s312, %s314
    %p321 = scmp.eq.s32.totalorder %s26, 1
    %p322 = por %p320, %p321
    %p323 = scmp.ne.s32.totalorder %s314, %s315
    %p324 = scmp.eq.s32.totalorder %s26, 0
    %p325 = por %p323, %p324
    %p326 = scmp.ne.s32.totalorder %s314, %s315
    %p327 = scmp.eq.s32.totalorder %s27, 1
    %p328 = por %p326, %p327
    %p330 = scmp.ne.s32.totalorder %s315, %s329
    %p331 = scmp.eq.s32.totalorder %s27, 0
    %p332 = por %p330, %p331
    %s334 = sadd.s32 %s333, 1
    %p337 = scmp.eq.s32.totalorder %s21, 1
    %p338 = scmp.ne.s32.totalorder %s333, %s335
    %p339 = scmp.eq.s32.totalorder %s21, 0
    %p340 = por %p338, %p339
    %p341 = scmp.ne.s32.totalorder %s333, %s335
    %p342 = scmp.eq.s32.totalorder %s26, 1
    %p343 = por %p341, %p342
    %p344 = scmp.ne.s32.totalorder %s335, %s336
    %p345 = scmp.eq.s32.totalorder %s26, 0
    %p346 = por %p344, %p345
    %p347 = scmp.ne.s32.totalorder %s335, %s336
    %p348 = scmp.eq.s32.totalorder %s27, 1
    %p349 = por %p347, %p348
    %p351 = scmp.ne.s32.totalorder %s336, %s350
    %p352 = scmp.eq.s32.totalorder %s27, 0
    %p353 = por %p351, %p352
    %s354 = ssub.s32 %s21, %s28
    %p355 = scmp.eq.s32.totalorder %s354, 0
    %s357 = sadd.s32 %s356, 1
    %s358 = scalar_select %p355, %s356, %s357
    %p361 = pneg %p355
    %p362 = scmp.eq.s32.totalorder %s21, 1
    %p363 = por %p361, %p362
    %p364 = scmp.ne.s32.totalorder %s356, %s359
    %p365 = scmp.eq.s32.totalorder %s21, 0
    %p366 = por %p364, %p365
    %p367 = scmp.ne.s32.totalorder %s356, %s359
    %p368 = scmp.eq.s32.totalorder %s26, 1
    %p369 = por %p367, %p368
    %p370 = scmp.ne.s32.totalorder %s359, %s360
    %p371 = scmp.eq.s32.totalorder %s26, 0
    %p372 = por %p370, %p371
    %p373 = scmp.ne.s32.totalorder %s359, %s360
    %p374 = scmp.eq.s32.totalorder %s27, 1
    %p375 = por %p373, %p374
    %p377 = scmp.ne.s32.totalorder %s360, %s376
    %p378 = scmp.eq.s32.totalorder %s27, 0
    %p379 = por %p377, %p378
    %p380 = scmp.le.s32.totalorder 1, %s21
    %p381 = scmp.lt.s32.totalorder %s21, 3
    %p382 = pnand %p380, %p381
    %p383 = pneg %p382
    // Predicated region
    $region9: #{forward_model.1} parent=5 // pred_check
      _
    $region10: #{forward_model.1} parent=5 // pred_check_branch
      %385 = sbr.rel (%p382) target = $region12
    $region11: #{forward_model.1} parent=5 // pred_region
      %s386 = ssub.s32 %s21, 1
      // Predicated region
      $region13: #{forward_model.1} parent=11 // pred_check
        %p387 = pneg %p94
      $region14: #{forward_model.1} parent=11 // pred_check_branch
        %389 = sbr.rel (%p387) target = $region16
      $region15: #{forward_model.1} parent=11 // pred_region
        _
      $region16: #{forward_model.1} parent=11 // pred_fallthru
        _
      // Predicated region
      $region17: #{forward_model.1} parent=11 // pred_check
        %p390 = pneg %p115
      $region18: #{forward_model.1} parent=11 // pred_check_branch
        %392 = sbr.rel (%p390) target = $region20
      $region19: #{forward_model.1} parent=11 // pred_region
        _
      $region20: #{forward_model.1} parent=11 // pred_fallthru
        _
      // Predicated region
      $region21: #{forward_model.1} parent=11 // pred_check
        %p393 = pneg %p136
      $region22: #{forward_model.1} parent=11 // pred_check_branch
        %395 = sbr.rel (%p393) target = $region24
      $region23: #{forward_model.1} parent=11 // pred_region
        _
      $region24: #{forward_model.1} parent=11 // pred_fallthru
        _
      // Predicated region
      $region25: #{forward_model.1} parent=11 // pred_check
        %p396 = pneg %p157
      $region26: #{forward_model.1} parent=11 // pred_check_branch
        %398 = sbr.rel (%p396) target = $region28
      $region27: #{forward_model.1} parent=11 // pred_region
        _
      $region28: #{forward_model.1} parent=11 // pred_fallthru
        _
      // Predicated region
      $region29: #{forward_model.1} parent=11 // pred_check
        %p399 = pneg %p178
      $region30: #{forward_model.1} parent=11 // pred_check_branch
        %401 = sbr.rel (%p399) target = $region32
      $region31: #{forward_model.1} parent=11 // pred_region
        _
      $region32: #{forward_model.1} parent=11 // pred_fallthru
        _
      // Predicated region
      $region33: #{forward_model.1} parent=11 // pred_check
        %p402 = pneg %p199
      $region34: #{forward_model.1} parent=11 // pred_check_branch
        %404 = sbr.rel (%p402) target = $region36
      $region35: #{forward_model.1} parent=11 // pred_region
        _
      $region36: #{forward_model.1} parent=11 // pred_fallthru
        _
      // Predicated region
      $region37: #{forward_model.1} parent=11 // pred_check
        %p405 = pneg %p220
      $region38: #{forward_model.1} parent=11 // pred_check_branch
        %407 = sbr.rel (%p405) target = $region40
      $region39: #{forward_model.1} parent=11 // pred_region
        _
      $region40: #{forward_model.1} parent=11 // pred_fallthru
        _
      // Predicated region
      $region41: #{forward_model.1} parent=11 // pred_check
        %p408 = pneg %p241
      $region42: #{forward_model.1} parent=11 // pred_check_branch
        %410 = sbr.rel (%p408) target = $region44
      $region43: #{forward_model.1} parent=11 // pred_region
        _
      $region44: #{forward_model.1} parent=11 // pred_fallthru
        _
      // Predicated region
      $region45: #{forward_model.1} parent=11 // pred_check
        %p411 = pneg %p262
      $region46: #{forward_model.1} parent=11 // pred_check_branch
        %413 = sbr.rel (%p411) target = $region48
      $region47: #{forward_model.1} parent=11 // pred_region
        _
      $region48: #{forward_model.1} parent=11 // pred_fallthru
        _
      // Predicated region
      $region49: #{forward_model.1} parent=11 // pred_check
        %p414 = pneg %p283
      $region50: #{forward_model.1} parent=11 // pred_check_branch
        %416 = sbr.rel (%p414) target = $region52
      $region51: #{forward_model.1} parent=11 // pred_region
        _
      $region52: #{forward_model.1} parent=11 // pred_fallthru
        _
      // Predicated region
      $region53: #{forward_model.1} parent=11 // pred_check
        %p417 = pneg %p304
      $region54: #{forward_model.1} parent=11 // pred_check_branch
        %419 = sbr.rel (%p417) target = $region56
      $region55: #{forward_model.1} parent=11 // pred_region
        _
      $region56: #{forward_model.1} parent=11 // pred_fallthru
        _
      // Predicated region
      $region57: #{forward_model.1} parent=11 // pred_check
        %p420 = pneg %p325
      $region58: #{forward_model.1} parent=11 // pred_check_branch
        %422 = sbr.rel (%p420) target = $region60
      $region59: #{forward_model.1} parent=11 // pred_region
        _
      $region60: #{forward_model.1} parent=11 // pred_fallthru
        _
      // Predicated region
      $region61: #{forward_model.1} parent=11 // pred_check
        %p423 = pneg %p346
      $region62: #{forward_model.1} parent=11 // pred_check_branch
        %425 = sbr.rel (%p423) target = $region64
      $region63: #{forward_model.1} parent=11 // pred_region
        _
      $region64: #{forward_model.1} parent=11 // pred_fallthru
        _
    $region12: #{forward_model.1} parent=5 // pred_fallthru
      _
    %p426 = scmp.lt.s32.totalorder %s21, 2
    // Predicated region
    $region65: #{forward_model.1} parent=5 // pred_check
      %p427 = pneg %p426
    $region66: #{forward_model.1} parent=5 // pred_check_branch
      %429 = sbr.rel (%p427) target = $region68
    $region67: #{forward_model.1} parent=5 // pred_region
      // Predicated region
      $region69: #{forward_model.1} parent=67 // pred_check
        %p430 = pneg %p41
      $region70: #{forward_model.1} parent=67 // pred_check_branch
        %432 = sbr.rel (%p430) target = $region72
      $region71: #{forward_model.1} parent=67 // pred_region
        %s433 = smul.u32 16, %s21
        %p434 = scmp.lt.s32.totalorder %s433, 31
        %s435 = scalar_select %p434, %s433, 31
        %s436 = smul.addr %s435, 8
        %s437 = scalar_lea.vmem %s0, %s436
        %s438 = smul.u32 16, %s21
      $region72: #{forward_model.1} parent=67 // pred_fallthru
        _
      // Predicated region
      $region73: #{forward_model.1} parent=67 // pred_check
        %p439 = pneg %p67
      $region74: #{forward_model.1} parent=67 // pred_check_branch
        %441 = sbr.rel (%p439) target = $region76
      $region75: #{forward_model.1} parent=67 // pred_region
        %s442 = smul.u32 16, %s21
        %p443 = scmp.lt.s32.totalorder %s442, 31
        %s444 = scalar_select %p443, %s442, 31
        %s445 = smul.addr %s444, 8
        %s446 = scalar_lea.vmem %s1, %s445
        %s447 = smul.u32 16, %s21
      $region76: #{forward_model.1} parent=67 // pred_fallthru
        _
    $region68: #{forward_model.1} parent=5 // pred_fallthru
      _
    %p448 = scmp.le.s32.totalorder 1, %s21
    %p449 = scmp.lt.s32.totalorder %s21, 3
    %p450 = pnand %p448, %p449
    %p451 = pneg %p450
    // Predicated region
    $region77: #{forward_model.1} parent=5 // pred_check
      _
    $region78: #{forward_model.1} parent=5 // pred_check_branch
      %453 = sbr.rel (%p450) target = $region80
    $region79: #{forward_model.1} parent=5 // pred_region
      %s454 = ssub.s32 %s21, 1
      %s455 = smul.u32 16, %s26
      %p456 = scmp.lt.s32.totalorder %s455, 31
      %s457 = scalar_select %p456, %s455, 31
      %s458 = smul.addr %s457, 8
      %s459 = scalar_lea.vmem %s0, %s458
      %p460 = pneg %p47
      %p461 = pneg %p44
      %s462 = smul.u32 16, %s26
      %p463 = scmp.lt.s32.totalorder %s462, 31
      %s464 = scalar_select %p463, %s462, 31
      %s465 = smul.addr %s464, 8
      %s466 = scalar_lea.vmem %s1, %s465
      %p467 = pneg %p73
      %p468 = pneg %p70
      %p469 = pneg %p94
      %p470 = pneg %p91
      %p471 = pneg %p115
      %p472 = pneg %p112
      %p473 = pneg %p136
      %p474 = pneg %p133
      %p475 = pneg %p157
      %p476 = pneg %p154
      %p477 = pneg %p178
      %p478 = pneg %p175
      %p479 = pneg %p199
      %p480 = pneg %p196
      %p481 = pneg %p220
      %p482 = pneg %p217
      %p483 = pneg %p241
      %p484 = pneg %p238
      %p485 = pneg %p262
      %p486 = pneg %p259
      %p487 = pneg %p283
      %p488 = pneg %p280
      %p489 = pneg %p304
      %p490 = pneg %p301
      %p491 = pneg %p325
      %p492 = pneg %p322
      %p493 = pneg %p346
      %p494 = pneg %p343
      %p495 = pneg %p372
      %p496 = pneg %p369
      %s497 = smul.u32 16, %s26
      %p498 = scmp.lt.s32.totalorder %s497, 31
      %s499 = scalar_select %p498, %s497, 31
      %s500 = smul.addr %s499, 4
      %s501 = scalar_lea.vmem %s15, %s500
      %s502 = smul.u32 16, %s26
      %p503 = scmp.lt.s32.totalorder %s502, 31
      %s504 = scalar_select %p503, %s502, 31
      %s505 = smul.addr %s504, 8
      %s506 = scalar_lea.vmem %s0, %s505
      %s507 = smul.u32 16, %s26
      %s508 = smul.u32 16, %s26
      %p509 = scmp.lt.s32.totalorder %s508, 31
      %s510 = scalar_select %p509, %s508, 31
      %s511 = smul.addr %s510, 8
      %s512 = scalar_lea.vmem %s1, %s511
      %s513 = smul.u32 16, %s26
      %s514 = smul.u32 16, %s26
      %p515 = scmp.lt.s32.totalorder %s514, 31
      %s516 = scalar_select %p515, %s514, 31
      %s517 = smul.addr %s516, 4
      %s518 = scalar_lea.vmem %s15, %s517
      %s519 = smul.u32 16, %s26
      %v521 = vld [vmem:[%s506] sm:$0xff]
      %v522 = vld [vmem:[%s506 + $0x8] sm:$0xff]
      %v523 = vld [vmem:[%s506 + $0x10] sm:$0xff]
      %v524 = vld [vmem:[%s506 + $0x18] sm:$0xff]
      %v525 = vld [vmem:[%s506 + $0x20] sm:$0xff]
      %v526 = vld [vmem:[%s506 + $0x28] sm:$0xff]
      %v527 = vld [vmem:[%s506 + $0x30] sm:$0xff]
      %v528 = vld [vmem:[%s506 + $0x38] sm:$0xff]
      %v529 = vld [vmem:[%s506 + $0x40] sm:$0xff]
      %v530 = vld [vmem:[%s506 + $0x48] sm:$0xff]
      %v531 = vld [vmem:[%s506 + $0x50] sm:$0xff]
      %v532 = vld [vmem:[%s506 + $0x58] sm:$0xff]
      %v533 = vld [vmem:[%s506 + $0x60] sm:$0xff]
      %v534 = vld [vmem:[%s506 + $0x68] sm:$0xff]
      %v535 = vld [vmem:[%s506 + $0x70] sm:$0xff]
      %v536 = vld [vmem:[%s506 + $0x78] sm:$0xff]
      %v537 = vpack.c.bf16 %v522, %v521
      %v538 = vpack.c.bf16 %v524, %v523
      %v539 = vpack.c.bf16 %v526, %v525
      %v540 = vpack.c.bf16 %v528, %v527
      %v541 = vpack.c.bf16 %v530, %v529
      %v542 = vpack.c.bf16 %v532, %v531
      %v543 = vpack.c.bf16 %v534, %v533
      %v544 = vpack.c.bf16 %v536, %v535
      %v545 = vld [vmem:[%s512] sm:$0xff]
      %v546 = vld [vmem:[%s512 + $0x8] sm:$0xff]
      %v547 = vld [vmem:[%s512 + $0x10] sm:$0xff]
      %v548 = vld [vmem:[%s512 + $0x18] sm:$0xff]
      %v549 = vld [vmem:[%s512 + $0x20] sm:$0xff]
      %v550 = vld [vmem:[%s512 + $0x28] sm:$0xff]
      %v551 = vld [vmem:[%s512 + $0x30] sm:$0xff]
      %v552 = vld [vmem:[%s512 + $0x38] sm:$0xff]
      %v553 = vld [vmem:[%s512 + $0x40] sm:$0xff]
      %v554 = vld [vmem:[%s512 + $0x48] sm:$0xff]
      %v555 = vld [vmem:[%s512 + $0x50] sm:$0xff]
      %v556 = vld [vmem:[%s512 + $0x58] sm:$0xff]
      %v557 = vld [vmem:[%s512 + $0x60] sm:$0xff]
      %v558 = vld [vmem:[%s512 + $0x68] sm:$0xff]
      %v559 = vld [vmem:[%s512 + $0x70] sm:$0xff]
      %v560 = vld [vmem:[%s512 + $0x78] sm:$0xff]
      %v561 = vpack.c.bf16 %v546, %v545
      %v562 = vpack.c.bf16 %v548, %v547
      %v563 = vpack.c.bf16 %v550, %v549
      %v564 = vpack.c.bf16 %v552, %v551
      %v565 = vpack.c.bf16 %v554, %v553
      %v566 = vpack.c.bf16 %v556, %v555
      %v567 = vpack.c.bf16 %v558, %v557
      %v568 = vpack.c.bf16 %v560, %v559
      %v569 = vld [vmem:[%s2] sm:$0xf]
      %v570 = vld [vmem:[%s2 + $0x4] sm:$0xf]
      %v571 = vld [vmem:[%s3] sm:$0x3]
      %vm572 = vcmask 31744
      %v574 = vsel %vm572, %v561, 0
      %v577 = vsel %vm572, %v562, 0
      %v580 = vsel %vm572, %v563, 0
      %v583 = vsel %vm572, %v564, 0
      %v586 = vsel %vm572, %v565, 0
      %v589 = vsel %vm572, %v566, 0
      %v592 = vsel %vm572, %v567, 0
      %v595 = vsel %vm572, %v568, 0
      %vm597 = vcmask 1041408
      %v599 = vsel %vm597, %v571, 0
      %601 = vmatpush.bf16.msra.mxu0 0
      %602 = vmatpush.bf16.msra.mxu0 0
      %603 = vmatpush.bf16.msra.mxu0 0
      %604 = vmatpush.bf16.msra.mxu0 0
      %605 = vmatpush.bf16.msra.mxu0 0
      %606 = vmatpush.bf16.msra.mxu0 0
      %607 = vmatpush.bf16.msra.mxu0 0
      %608 = vmatpush.bf16.msra.mxu0 %v599
      %609 = vmatmul.bf16.gmra.mxu0 %v574
      %v610 = vpop.f32.mrf.mxu0
      %v611 = vadd.f32 0.0, %v610
      %v612 = vpop.f32.mrf.mxu0
      %v613 = vadd.f32 0.0, %v612
      %614 = vmatmul.bf16.gmra.mxu0 %v577
      %v615 = vpop.f32.mrf.mxu0
      %v616 = vadd.f32 0.0, %v615
      %v617 = vpop.f32.mrf.mxu0
      %v618 = vadd.f32 0.0, %v617
      %619 = vmatmul.bf16.gmra.mxu0 %v580
      %v620 = vpop.f32.mrf.mxu0
      %v621 = vadd.f32 0.0, %v620
      %v622 = vpop.f32.mrf.mxu0
      %v623 = vadd.f32 0.0, %v622
      %624 = vmatmul.bf16.gmra.mxu0 %v583
      %v625 = vpop.f32.mrf.mxu0
      %v626 = vadd.f32 0.0, %v625
      %v627 = vpop.f32.mrf.mxu0
      %v628 = vadd.f32 0.0, %v627
      %629 = vmatmul.bf16.gmra.mxu0 %v586
      %v630 = vpop.f32.mrf.mxu0
      %v631 = vadd.f32 0.0, %v630
      %v632 = vpop.f32.mrf.mxu0
      %v633 = vadd.f32 0.0, %v632
      %634 = vmatmul.bf16.gmra.mxu0 %v589
      %v635 = vpop.f32.mrf.mxu0
      %v636 = vadd.f32 0.0, %v635
      %v637 = vpop.f32.mrf.mxu0
      %v638 = vadd.f32 0.0, %v637
      %639 = vmatmul.bf16.gmra.mxu0 %v592
      %v640 = vpop.f32.mrf.mxu0
      %v641 = vadd.f32 0.0, %v640
      %v642 = vpop.f32.mrf.mxu0
      %v643 = vadd.f32 0.0, %v642
      %644 = vmatmul.bf16.gmra.mxu0 %v595
      %v645 = vpop.f32.mrf.mxu0
      %v646 = vadd.f32 0.0, %v645
      %v647 = vpop.f32.mrf.mxu0
      %v648 = vadd.f32 0.0, %v647
      %649 = vdwg.mxu0
      %v652 = vunpack.c.l.b16 %v569
      %v653 = vunpack.c.l.b16 %v570
      %v654 = vpack.c.b16 %v653, %v652
      %vm656 = vcmask 130048
      %v658 = vsel %vm656, %v537, 0
      %v661 = vsel %vm656, %v538, 0
      %v664 = vsel %vm656, %v539, 0
      %v667 = vsel %vm656, %v540, 0
      %v670 = vsel %vm656, %v541, 0
      %v673 = vsel %vm656, %v542, 0
      %v676 = vsel %vm656, %v543, 0
      %v679 = vsel %vm656, %v544, 0
      %681 = vmatpush.bf16.msra.mxu0 0
      %682 = vmatpush.bf16.msra.mxu0 0
      %683 = vmatpush.bf16.msra.mxu0 0
      %684 = vmatpush.bf16.msra.mxu0 0
      %685 = vmatpush.bf16.msra.mxu0 0
      %686 = vmatpush.bf16.msra.mxu0 0
      %687 = vmatpush.bf16.msra.mxu0 0
      %688 = vmatpush.bf16.msra.mxu0 %v654
      %689 = vmatmul.bf16.gmra.mxu0 %v658
      %v690 = vpop.f32.mrf.mxu0
      %v691 = vadd.f32 %v611, %v690
      %v692 = vpop.f32.mrf.mxu0
      %v693 = vadd.f32 %v613, %v692
      %694 = vmatmul.bf16.gmra.mxu0 %v661
      %v695 = vpop.f32.mrf.mxu0
      %v696 = vadd.f32 %v616, %v695
      %v697 = vpop.f32.mrf.mxu0
      %v698 = vadd.f32 %v618, %v697
      %699 = vmatmul.bf16.gmra.mxu0 %v664
      %v700 = vpop.f32.mrf.mxu0
      %v701 = vadd.f32 %v621, %v700
      %v702 = vpop.f32.mrf.mxu0
      %v703 = vadd.f32 %v623, %v702
      %704 = vmatmul.bf16.gmra.mxu0 %v667
      %v705 = vpop.f32.mrf.mxu0
      %v706 = vadd.f32 %v626, %v705
      %v707 = vpop.f32.mrf.mxu0
      %v708 = vadd.f32 %v628, %v707
      %709 = vmatmul.bf16.gmra.mxu0 %v670
      %v710 = vpop.f32.mrf.mxu0
      %v711 = vadd.f32 %v631, %v710
      %v712 = vpop.f32.mrf.mxu0
      %v713 = vadd.f32 %v633, %v712
      %714 = vmatmul.bf16.gmra.mxu0 %v673
      %v715 = vpop.f32.mrf.mxu0
      %v716 = vadd.f32 %v636, %v715
      %v717 = vpop.f32.mrf.mxu0
      %v718 = vadd.f32 %v638, %v717
      %719 = vmatmul.bf16.gmra.mxu0 %v676
      %v720 = vpop.f32.mrf.mxu0
      %v721 = vadd.f32 %v641, %v720
      %v722 = vpop.f32.mrf.mxu0
      %v723 = vadd.f32 %v643, %v722
      %724 = vmatmul.bf16.gmra.mxu0 %v679
      %v725 = vpop.f32.mrf.mxu0
      %v726 = vadd.f32 %v646, %v725
      %v727 = vpop.f32.mrf.mxu0
      %v728 = vadd.f32 %v648, %v727
      %729 = vdwg.mxu0
      %v730 = vld [vmem:[%s4] sm:$0x1]
      %v732 = vperm.slane %v730, 0
      %v734 = vadd.f32 %v691, %v732
      %v735 = vadd.f32 %v693, %v732
      %v736 = vadd.f32 %v696, %v732
      %v737 = vadd.f32 %v698, %v732
      %v738 = vadd.f32 %v701, %v732
      %v739 = vadd.f32 %v703, %v732
      %v740 = vadd.f32 %v706, %v732
      %v741 = vadd.f32 %v708, %v732
      %v742 = vadd.f32 %v711, %v732
      %v743 = vadd.f32 %v713, %v732
      %v744 = vadd.f32 %v716, %v732
      %v745 = vadd.f32 %v718, %v732
      %v746 = vadd.f32 %v721, %v732
      %v747 = vadd.f32 %v723, %v732
      %v748 = vadd.f32 %v726, %v732
      %v749 = vadd.f32 %v728, %v732
      %v750 = vmax.f32 %v734, 0.0
      %v751 = vmax.f32 %v735, 0.0
      %v752 = vmax.f32 %v736, 0.0
      %v753 = vmax.f32 %v737, 0.0
      %v754 = vmax.f32 %v738, 0.0
      %v755 = vmax.f32 %v739, 0.0
      %v756 = vmax.f32 %v740, 0.0
      %v757 = vmax.f32 %v741, 0.0
      %v758 = vmax.f32 %v742, 0.0
      %v759 = vmax.f32 %v743, 0.0
      %v760 = vmax.f32 %v744, 0.0
      %v761 = vmax.f32 %v745, 0.0
      %v762 = vmax.f32 %v746, 0.0
      %v763 = vmax.f32 %v747, 0.0
      %v764 = vmax.f32 %v748, 0.0
      %v765 = vmax.f32 %v749, 0.0
      %v766 = vpack.c.bf16 %v751, %v750
      %v767 = vpack.c.bf16 %v753, %v752
      %v768 = vpack.c.bf16 %v755, %v754
      %v769 = vpack.c.bf16 %v757, %v756
      %v770 = vpack.c.bf16 %v759, %v758
      %v771 = vpack.c.bf16 %v761, %v760
      %v772 = vpack.c.bf16 %v763, %v762
      %v773 = vpack.c.bf16 %v765, %v764
      %v774 = vld [vmem:[%s5] sm:$0xf]
      %v775 = vld [vmem:[%s5 + $0x4] sm:$0xf]
      %v776 = vld [vmem:[%s5 + $0x8] sm:$0xf]
      %v777 = vld [vmem:[%s5 + $0xc] sm:$0xf]
      %v778 = vld [vmem:[%s5 + $0x10] sm:$0xf]
      %v779 = vld [vmem:[%s5 + $0x14] sm:$0xf]
      %v780 = vld [vmem:[%s5 + $0x18] sm:$0xf]
      %v781 = vld [vmem:[%s5 + $0x1c] sm:$0xf]
      %v782 = vld [vmem:[%s5 + $0x20] sm:$0xf]
      %v783 = vld [vmem:[%s5 + $0x24] sm:$0xf]
      %v784 = vld [vmem:[%s5 + $0x28] sm:$0xf]
      %v785 = vld [vmem:[%s5 + $0x2c] sm:$0xf]
      %v786 = vld [vmem:[%s5 + $0x30] sm:$0xf]
      %v787 = vld [vmem:[%s5 + $0x34] sm:$0xf]
      %v788 = vld [vmem:[%s5 + $0x38] sm:$0xf]
      %v789 = vld [vmem:[%s5 + $0x3c] sm:$0xf]
      %v790 = vld [vmem:[%s6] sm:$0x1]
      %v792 = vperm.slane %v790, 0
      %v810 = vunpack.c.l.b16 %v774
      %v811 = vunpack.c.l.b16 %v775
      %v812 = vunpack.c.l.b16 %v776
      %v813 = vunpack.c.l.b16 %v777
      %v814 = vunpack.c.l.b16 %v778
      %v815 = vunpack.c.l.b16 %v779
      %v816 = vunpack.c.l.b16 %v780
      %v817 = vunpack.c.l.b16 %v781
      %v818 = vunpack.c.l.b16 %v782
      %v819 = vunpack.c.l.b16 %v783
      %v820 = vunpack.c.l.b16 %v784
      %v821 = vunpack.c.l.b16 %v785
      %v822 = vunpack.c.l.b16 %v786
      %v823 = vunpack.c.l.b16 %v787
      %v824 = vunpack.c.l.b16 %v788
      %v825 = vunpack.c.l.b16 %v789
      %v826 = vpack.c.b16 %v811, %v810
      %v827 = vpack.c.b16 %v813, %v812
      %v828 = vpack.c.b16 %v815, %v814
      %v829 = vpack.c.b16 %v817, %v816
      %v830 = vpack.c.b16 %v819, %v818
      %v831 = vpack.c.b16 %v821, %v820
      %v832 = vpack.c.b16 %v823, %v822
      %v833 = vpack.c.b16 %v825, %v824
      %842 = vmatpush.bf16.msra.mxu0 %v833
      %843 = vmatpush.bf16.msra.mxu0 %v832
      %844 = vmatpush.bf16.msra.mxu0 %v831
      %845 = vmatpush.bf16.msra.mxu0 %v830
      %846 = vmatpush.bf16.msra.mxu0 %v829
      %847 = vmatpush.bf16.msra.mxu0 %v828
      %848 = vmatpush.bf16.msra.mxu0 %v827
      %849 = vmatpush.bf16.msra.mxu0 %v826
      %850 = vmatmul.bf16.gmra.mxu0 %v766
      %v851 = vpop.f32.mrf.mxu0
      %v852 = vadd.f32 %v792, %v851
      %v853 = vpop.f32.mrf.mxu0
      %v854 = vadd.f32 %v792, %v853
      %855 = vmatmul.bf16.gmra.mxu0 %v767
      %v856 = vpop.f32.mrf.mxu0
      %v857 = vadd.f32 %v792, %v856
      %v858 = vpop.f32.mrf.mxu0
      %v859 = vadd.f32 %v792, %v858
      %860 = vmatmul.bf16.gmra.mxu0 %v768
      %v861 = vpop.f32.mrf.mxu0
      %v862 = vadd.f32 %v792, %v861
      %v863 = vpop.f32.mrf.mxu0
      %v864 = vadd.f32 %v792, %v863
      %865 = vmatmul.bf16.gmra.mxu0 %v769
      %v866 = vpop.f32.mrf.mxu0
      %v867 = vadd.f32 %v792, %v866
      %v868 = vpop.f32.mrf.mxu0
      %v869 = vadd.f32 %v792, %v868
      %870 = vmatmul.bf16.gmra.mxu0 %v770
      %v871 = vpop.f32.mrf.mxu0
      %v872 = vadd.f32 %v792, %v871
      %v873 = vpop.f32.mrf.mxu0
      %v874 = vadd.f32 %v792, %v873
      %875 = vmatmul.bf16.gmra.mxu0 %v771
      %v876 = vpop.f32.mrf.mxu0
      %v877 = vadd.f32 %v792, %v876
      %v878 = vpop.f32.mrf.mxu0
      %v879 = vadd.f32 %v792, %v878
      %880 = vmatmul.bf16.gmra.mxu0 %v772
      %v881 = vpop.f32.mrf.mxu0
      %v882 = vadd.f32 %v792, %v881
      %v883 = vpop.f32.mrf.mxu0
      %v884 = vadd.f32 %v792, %v883
      %885 = vmatmul.bf16.gmra.mxu0 %v773
      %v886 = vpop.f32.mrf.mxu0
      %v887 = vadd.f32 %v792, %v886
      %v888 = vpop.f32.mrf.mxu0
      %v889 = vadd.f32 %v792, %v888
      %890 = vdwg.mxu0
      %891 = vadd.xlane.f32.xlu0 %v852
      %v892 = vpop.xlane.xlu0 %891
      %893 = vadd.xlane.f32.xlu0 %v854
      %v894 = vpop.xlane.xlu0 %893
      %895 = vadd.xlane.f32.xlu0 %v857
      %v896 = vpop.xlane.xlu0 %895
      %897 = vadd.xlane.f32.xlu0 %v859
      %v898 = vpop.xlane.xlu0 %897
      %899 = vadd.xlane.f32.xlu0 %v862
      %v900 = vpop.xlane.xlu0 %899
      %901 = vadd.xlane.f32.xlu0 %v864
      %v902 = vpop.xlane.xlu0 %901
      %903 = vadd.xlane.f32.xlu0 %v867
      %v904 = vpop.xlane.xlu0 %903
      %905 = vadd.xlane.f32.xlu0 %v869
      %v906 = vpop.xlane.xlu0 %905
      %907 = vadd.xlane.f32.xlu0 %v872
      %v908 = vpop.xlane.xlu0 %907
      %909 = vadd.xlane.f32.xlu0 %v874
      %v910 = vpop.xlane.xlu0 %909
      %911 = vadd.xlane.f32.xlu0 %v877
      %v912 = vpop.xlane.xlu0 %911
      %913 = vadd.xlane.f32.xlu0 %v879
      %v914 = vpop.xlane.xlu0 %913
      %915 = vadd.xlane.f32.xlu0 %v882
      %v916 = vpop.xlane.xlu0 %915
      %917 = vadd.xlane.f32.xlu0 %v884
      %v918 = vpop.xlane.xlu0 %917
      %919 = vadd.xlane.f32.xlu0 %v887
      %v920 = vpop.xlane.xlu0 %919
      %921 = vadd.xlane.f32.xlu0 %v889
      %v922 = vpop.xlane.xlu0 %921
      %v923 = vrcp.pop 128.0
      %v924 = vmul.f32 128.0, %v923
      %v925 = vsub.f32 1.0, %v924
      %v926 = vmul.f32 %v923, %v925
      %v927 = vadd.f32 %v923, %v926
      %vm928 = vweird.f32 %v923
      %v929 = vsel %vm928, %v923, %v927
      %v930 = vmul.f32 %v892, %v929
      %v931 = vmul.f32 %v894, %v929
      %v932 = vmul.f32 %v896, %v929
      %v933 = vmul.f32 %v898, %v929
      %v934 = vmul.f32 %v900, %v929
      %v935 = vmul.f32 %v902, %v929
      %v936 = vmul.f32 %v904, %v929
      %v937 = vmul.f32 %v906, %v929
      %v938 = vmul.f32 %v908, %v929
      %v939 = vmul.f32 %v910, %v929
      %v940 = vmul.f32 %v912, %v929
      %v941 = vmul.f32 %v914, %v929
      %v942 = vmul.f32 %v916, %v929
      %v943 = vmul.f32 %v918, %v929
      %v944 = vmul.f32 %v920, %v929
      %v945 = vmul.f32 %v922, %v929
      %v946 = vsub.f32 %v852, %v930
      %v947 = vsub.f32 %v854, %v931
      %v948 = vsub.f32 %v857, %v932
      %v949 = vsub.f32 %v859, %v933
      %v950 = vsub.f32 %v862, %v934
      %v951 = vsub.f32 %v864, %v935
      %v952 = vsub.f32 %v867, %v936
      %v953 = vsub.f32 %v869, %v937
      %v954 = vsub.f32 %v872, %v938
      %v955 = vsub.f32 %v874, %v939
      %v956 = vsub.f32 %v877, %v940
      %v957 = vsub.f32 %v879, %v941
      %v958 = vsub.f32 %v882, %v942
      %v959 = vsub.f32 %v884, %v943
      %v960 = vsub.f32 %v887, %v944
      %v961 = vsub.f32 %v889, %v945
      %v962 = vmul.f32 %v946, %v946
      %v963 = vmul.f32 %v947, %v947
      %v964 = vmul.f32 %v948, %v948
      %v965 = vmul.f32 %v949, %v949
      %v966 = vmul.f32 %v950, %v950
      %v967 = vmul.f32 %v951, %v951
      %v968 = vmul.f32 %v952, %v952
      %v969 = vmul.f32 %v953, %v953
      %v970 = vmul.f32 %v954, %v954
      %v971 = vmul.f32 %v955, %v955
      %v972 = vmul.f32 %v956, %v956
      %v973 = vmul.f32 %v957, %v957
      %v974 = vmul.f32 %v958, %v958
      %v975 = vmul.f32 %v959, %v959
      %v976 = vmul.f32 %v960, %v960
      %v977 = vmul.f32 %v961, %v961
      %978 = vadd.xlane.f32.xlu0 %v962
      %v979 = vpop.xlane.xlu0 %978
      %980 = vadd.xlane.f32.xlu0 %v963
      %v981 = vpop.xlane.xlu0 %980
      %982 = vadd.xlane.f32.xlu0 %v964
      %v983 = vpop.xlane.xlu0 %982
      %984 = vadd.xlane.f32.xlu0 %v965
      %v985 = vpop.xlane.xlu0 %984
      %986 = vadd.xlane.f32.xlu0 %v966
      %v987 = vpop.xlane.xlu0 %986
      %988 = vadd.xlane.f32.xlu0 %v967
      %v989 = vpop.xlane.xlu0 %988
      %990 = vadd.xlane.f32.xlu0 %v968
      %v991 = vpop.xlane.xlu0 %990
      %992 = vadd.xlane.f32.xlu0 %v969
      %v993 = vpop.xlane.xlu0 %992
      %994 = vadd.xlane.f32.xlu0 %v970
      %v995 = vpop.xlane.xlu0 %994
      %996 = vadd.xlane.f32.xlu0 %v971
      %v997 = vpop.xlane.xlu0 %996
      %998 = vadd.xlane.f32.xlu0 %v972
      %v999 = vpop.xlane.xlu0 %998
      %1000 = vadd.xlane.f32.xlu0 %v973
      %v1001 = vpop.xlane.xlu0 %1000
      %1002 = vadd.xlane.f32.xlu0 %v974
      %v1003 = vpop.xlane.xlu0 %1002
      %1004 = vadd.xlane.f32.xlu0 %v975
      %v1005 = vpop.xlane.xlu0 %1004
      %1006 = vadd.xlane.f32.xlu0 %v976
      %v1007 = vpop.xlane.xlu0 %1006
      %1008 = vadd.xlane.f32.xlu0 %v977
      %v1009 = vpop.xlane.xlu0 %1008
      %v1010 = vmul.f32 %v979, %v929
      %v1011 = vmul.f32 %v981, %v929
      %v1012 = vmul.f32 %v983, %v929
      %v1013 = vmul.f32 %v985, %v929
      %v1014 = vmul.f32 %v987, %v929
      %v1015 = vmul.f32 %v989, %v929
      %v1016 = vmul.f32 %v991, %v929
      %v1017 = vmul.f32 %v993, %v929
      %v1018 = vmul.f32 %v995, %v929
      %v1019 = vmul.f32 %v997, %v929
      %v1020 = vmul.f32 %v999, %v929
      %v1021 = vmul.f32 %v1001, %v929
      %v1022 = vmul.f32 %v1003, %v929
      %v1023 = vmul.f32 %v1005, %v929
      %v1024 = vmul.f32 %v1007, %v929
      %v1025 = vmul.f32 %v1009, %v929
      %v1026 = vadd.f32 %v1010, 1e-05
      %v1027 = vadd.f32 %v1011, 1e-05
      %v1028 = vadd.f32 %v1012, 1e-05
      %v1029 = vadd.f32 %v1013, 1e-05
      %v1030 = vadd.f32 %v1014, 1e-05
      %v1031 = vadd.f32 %v1015, 1e-05
      %v1032 = vadd.f32 %v1016, 1e-05
      %v1033 = vadd.f32 %v1017, 1e-05
      %v1034 = vadd.f32 %v1018, 1e-05
      %v1035 = vadd.f32 %v1019, 1e-05
      %v1036 = vadd.f32 %v1020, 1e-05
      %v1037 = vadd.f32 %v1021, 1e-05
      %v1038 = vadd.f32 %v1022, 1e-05
      %v1039 = vadd.f32 %v1023, 1e-05
      %v1040 = vadd.f32 %v1024, 1e-05
      %v1041 = vadd.f32 %v1025, 1e-05
      %v1042 = vrsqrt.pop %v1026
      %v1043 = vmul.f32 %v1042, %v1026
      %v1044 = vmul.f32 %v1043, %v1042
      %v1045 = vmul.f32 0.5, %v1044
      %v1046 = vsub.f32 1.5, %v1045
      %v1047 = vmul.f32 %v1042, %v1046
      %vm1048 = vweird.f32 %v1026
      %vm1049 = vweird.f32 %v1042
      %vm1050 = vmor %vm1048, %vm1049
      %v1051 = vsel %vm1050, %v1042, %v1047
      %v1052 = vrsqrt.pop %v1027
      %v1053 = vmul.f32 %v1052, %v1027
      %v1054 = vmul.f32 %v1053, %v1052
      %v1055 = vmul.f32 0.5, %v1054
      %v1056 = vsub.f32 1.5, %v1055
      %v1057 = vmul.f32 %v1052, %v1056
      %vm1058 = vweird.f32 %v1027
      %vm1059 = vweird.f32 %v1052
      %vm1060 = vmor %vm1058, %vm1059
      %v1061 = vsel %vm1060, %v1052, %v1057
      %v1062 = vrsqrt.pop %v1028
      %v1063 = vmul.f32 %v1062, %v1028
      %v1064 = vmul.f32 %v1063, %v1062
      %v1065 = vmul.f32 0.5, %v1064
      %v1066 = vsub.f32 1.5, %v1065
      %v1067 = vmul.f32 %v1062, %v1066
      %vm1068 = vweird.f32 %v1028
      %vm1069 = vweird.f32 %v1062
      %vm1070 = vmor %vm1068, %vm1069
      %v1071 = vsel %vm1070, %v1062, %v1067
      %v1072 = vrsqrt.pop %v1029
      %v1073 = vmul.f32 %v1072, %v1029
      %v1074 = vmul.f32 %v1073, %v1072
      %v1075 = vmul.f32 0.5, %v1074
      %v1076 = vsub.f32 1.5, %v1075
      %v1077 = vmul.f32 %v1072, %v1076
      %vm1078 = vweird.f32 %v1029
      %vm1079 = vweird.f32 %v1072
      %vm1080 = vmor %vm1078, %vm1079
      %v1081 = vsel %vm1080, %v1072, %v1077
      %v1082 = vrsqrt.pop %v1030
      %v1083 = vmul.f32 %v1082, %v1030
      %v1084 = vmul.f32 %v1083, %v1082
      %v1085 = vmul.f32 0.5, %v1084
      %v1086 = vsub.f32 1.5, %v1085
      %v1087 = vmul.f32 %v1082, %v1086
      %vm1088 = vweird.f32 %v1030
      %vm1089 = vweird.f32 %v1082
      %vm1090 = vmor %vm1088, %vm1089
      %v1091 = vsel %vm1090, %v1082, %v1087
      %v1092 = vrsqrt.pop %v1031
      %v1093 = vmul.f32 %v1092, %v1031
      %v1094 = vmul.f32 %v1093, %v1092
      %v1095 = vmul.f32 0.5, %v1094
      %v1096 = vsub.f32 1.5, %v1095
      %v1097 = vmul.f32 %v1092, %v1096
      %vm1098 = vweird.f32 %v1031
      %vm1099 = vweird.f32 %v1092
      %vm1100 = vmor %vm1098, %vm1099
      %v1101 = vsel %vm1100, %v1092, %v1097
      %v1102 = vrsqrt.pop %v1032
      %v1103 = vmul.f32 %v1102, %v1032
      %v1104 = vmul.f32 %v1103, %v1102
      %v1105 = vmul.f32 0.5, %v1104
      %v1106 = vsub.f32 1.5, %v1105
      %v1107 = vmul.f32 %v1102, %v1106
      %vm1108 = vweird.f32 %v1032
      %vm1109 = vweird.f32 %v1102
      %vm1110 = vmor %vm1108, %vm1109
      %v1111 = vsel %vm1110, %v1102, %v1107
      %v1112 = vrsqrt.pop %v1033
      %v1113 = vmul.f32 %v1112, %v1033
      %v1114 = vmul.f32 %v1113, %v1112
      %v1115 = vmul.f32 0.5, %v1114
      %v1116 = vsub.f32 1.5, %v1115
      %v1117 = vmul.f32 %v1112, %v1116
      %vm1118 = vweird.f32 %v1033
      %vm1119 = vweird.f32 %v1112
      %vm1120 = vmor %vm1118, %vm1119
      %v1121 = vsel %vm1120, %v1112, %v1117
      %v1122 = vrsqrt.pop %v1034
      %v1123 = vmul.f32 %v1122, %v1034
      %v1124 = vmul.f32 %v1123, %v1122
      %v1125 = vmul.f32 0.5, %v1124
      %v1126 = vsub.f32 1.5, %v1125
      %v1127 = vmul.f32 %v1122, %v1126
      %vm1128 = vweird.f32 %v1034
      %vm1129 = vweird.f32 %v1122
      %vm1130 = vmor %vm1128, %vm1129
      %v1131 = vsel %vm1130, %v1122, %v1127
      %v1132 = vrsqrt.pop %v1035
      %v1133 = vmul.f32 %v1132, %v1035
      %v1134 = vmul.f32 %v1133, %v1132
      %v1135 = vmul.f32 0.5, %v1134
      %v1136 = vsub.f32 1.5, %v1135
      %v1137 = vmul.f32 %v1132, %v1136
      %vm1138 = vweird.f32 %v1035
      %vm1139 = vweird.f32 %v1132
      %vm1140 = vmor %vm1138, %vm1139
      %v1141 = vsel %vm1140, %v1132, %v1137
      %v1142 = vrsqrt.pop %v1036
      %v1143 = vmul.f32 %v1142, %v1036
      %v1144 = vmul.f32 %v1143, %v1142
      %v1145 = vmul.f32 0.5, %v1144
      %v1146 = vsub.f32 1.5, %v1145
      %v1147 = vmul.f32 %v1142, %v1146
      %vm1148 = vweird.f32 %v1036
      %vm1149 = vweird.f32 %v1142
      %vm1150 = vmor %vm1148, %vm1149
      %v1151 = vsel %vm1150, %v1142, %v1147
      %v1152 = vrsqrt.pop %v1037
      %v1153 = vmul.f32 %v1152, %v1037
      %v1154 = vmul.f32 %v1153, %v1152
      %v1155 = vmul.f32 0.5, %v1154
      %v1156 = vsub.f32 1.5, %v1155
      %v1157 = vmul.f32 %v1152, %v1156
      %vm1158 = vweird.f32 %v1037
      %vm1159 = vweird.f32 %v1152
      %vm1160 = vmor %vm1158, %vm1159
      %v1161 = vsel %vm1160, %v1152, %v1157
      %v1162 = vrsqrt.pop %v1038
      %v1163 = vmul.f32 %v1162, %v1038
      %v1164 = vmul.f32 %v1163, %v1162
      %v1165 = vmul.f32 0.5, %v1164
      %v1166 = vsub.f32 1.5, %v1165
      %v1167 = vmul.f32 %v1162, %v1166
      %vm1168 = vweird.f32 %v1038
      %vm1169 = vweird.f32 %v1162
      %vm1170 = vmor %vm1168, %vm1169
      %v1171 = vsel %vm1170, %v1162, %v1167
      %v1172 = vrsqrt.pop %v1039
      %v1173 = vmul.f32 %v1172, %v1039
      %v1174 = vmul.f32 %v1173, %v1172
      %v1175 = vmul.f32 0.5, %v1174
      %v1176 = vsub.f32 1.5, %v1175
      %v1177 = vmul.f32 %v1172, %v1176
      %vm1178 = vweird.f32 %v1039
      %vm1179 = vweird.f32 %v1172
      %vm1180 = vmor %vm1178, %vm1179
      %v1181 = vsel %vm1180, %v1172, %v1177
      %v1182 = vrsqrt.pop %v1040
      %v1183 = vmul.f32 %v1182, %v1040
      %v1184 = vmul.f32 %v1183, %v1182
      %v1185 = vmul.f32 0.5, %v1184
      %v1186 = vsub.f32 1.5, %v1185
      %v1187 = vmul.f32 %v1182, %v1186
      %vm1188 = vweird.f32 %v1040
      %vm1189 = vweird.f32 %v1182
      %vm1190 = vmor %vm1188, %vm1189
      %v1191 = vsel %vm1190, %v1182, %v1187
      %v1192 = vrsqrt.pop %v1041
      %v1193 = vmul.f32 %v1192, %v1041
      %v1194 = vmul.f32 %v1193, %v1192
      %v1195 = vmul.f32 0.5, %v1194
      %v1196 = vsub.f32 1.5, %v1195
      %v1197 = vmul.f32 %v1192, %v1196
      %vm1198 = vweird.f32 %v1041
      %vm1199 = vweird.f32 %v1192
      %vm1200 = vmor %vm1198, %vm1199
      %v1201 = vsel %vm1200, %v1192, %v1197
      %v1202 = vmul.f32 %v946, %v1051
      %v1203 = vmul.f32 %v947, %v1061
      %v1204 = vmul.f32 %v948, %v1071
      %v1205 = vmul.f32 %v949, %v1081
      %v1206 = vmul.f32 %v950, %v1091
      %v1207 = vmul.f32 %v951, %v1101
      %v1208 = vmul.f32 %v952, %v1111
      %v1209 = vmul.f32 %v953, %v1121
      %v1210 = vmul.f32 %v954, %v1131
      %v1211 = vmul.f32 %v955, %v1141
      %v1212 = vmul.f32 %v956, %v1151
      %v1213 = vmul.f32 %v957, %v1161
      %v1214 = vmul.f32 %v958, %v1171
      %v1215 = vmul.f32 %v959, %v1181
      %v1216 = vmul.f32 %v960, %v1191
      %v1217 = vmul.f32 %v961, %v1201
      %v1218 = vld [vmem:[%s7] sm:$0x1]
      %v1220 = vperm.slane %v1218, 0
      %v1222 = vmul.f32 %v1202, %v1220
      %v1223 = vmul.f32 %v1203, %v1220
      %v1224 = vmul.f32 %v1204, %v1220
      %v1225 = vmul.f32 %v1205, %v1220
      %v1226 = vmul.f32 %v1206, %v1220
      %v1227 = vmul.f32 %v1207, %v1220
      %v1228 = vmul.f32 %v1208, %v1220
      %v1229 = vmul.f32 %v1209, %v1220
      %v1230 = vmul.f32 %v1210, %v1220
      %v1231 = vmul.f32 %v1211, %v1220
      %v1232 = vmul.f32 %v1212, %v1220
      %v1233 = vmul.f32 %v1213, %v1220
      %v1234 = vmul.f32 %v1214, %v1220
      %v1235 = vmul.f32 %v1215, %v1220
      %v1236 = vmul.f32 %v1216, %v1220
      %v1237 = vmul.f32 %v1217, %v1220
      %v1238 = vld [vmem:[%s8] sm:$0x1]
      %v1240 = vperm.slane %v1238, 0
      %v1242 = vadd.f32 %v1222, %v1240
      %v1243 = vadd.f32 %v1223, %v1240
      %v1244 = vadd.f32 %v1224, %v1240
      %v1245 = vadd.f32 %v1225, %v1240
      %v1246 = vadd.f32 %v1226, %v1240
      %v1247 = vadd.f32 %v1227, %v1240
      %v1248 = vadd.f32 %v1228, %v1240
      %v1249 = vadd.f32 %v1229, %v1240
      %v1250 = vadd.f32 %v1230, %v1240
      %v1251 = vadd.f32 %v1231, %v1240
      %v1252 = vadd.f32 %v1232, %v1240
      %v1253 = vadd.f32 %v1233, %v1240
      %v1254 = vadd.f32 %v1234, %v1240
      %v1255 = vadd.f32 %v1235, %v1240
      %v1256 = vadd.f32 %v1236, %v1240
      %v1257 = vadd.f32 %v1237, %v1240
      %v1258 = vmax.f32 %v1242, 0.0
      %v1259 = vmax.f32 %v1243, 0.0
      %v1260 = vmax.f32 %v1244, 0.0
      %v1261 = vmax.f32 %v1245, 0.0
      %v1262 = vmax.f32 %v1246, 0.0
      %v1263 = vmax.f32 %v1247, 0.0
      %v1264 = vmax.f32 %v1248, 0.0
      %v1265 = vmax.f32 %v1249, 0.0
      %v1266 = vmax.f32 %v1250, 0.0
      %v1267 = vmax.f32 %v1251, 0.0
      %v1268 = vmax.f32 %v1252, 0.0
      %v1269 = vmax.f32 %v1253, 0.0
      %v1270 = vmax.f32 %v1254, 0.0
      %v1271 = vmax.f32 %v1255, 0.0
      %v1272 = vmax.f32 %v1256, 0.0
      %v1273 = vmax.f32 %v1257, 0.0
      %v1274 = vpack.c.bf16 %v1259, %v1258
      %v1275 = vpack.c.bf16 %v1261, %v1260
      %v1276 = vpack.c.bf16 %v1263, %v1262
      %v1277 = vpack.c.bf16 %v1265, %v1264
      %v1278 = vpack.c.bf16 %v1267, %v1266
      %v1279 = vpack.c.bf16 %v1269, %v1268
      %v1280 = vpack.c.bf16 %v1271, %v1270
      %v1281 = vpack.c.bf16 %v1273, %v1272
      %v1282 = vld [vmem:[%s9] sm:$0xf]
      %v1283 = vld [vmem:[%s9 + $0x4] sm:$0xf]
      %v1284 = vld [vmem:[%s9 + $0x8] sm:$0xf]
      %v1285 = vld [vmem:[%s9 + $0xc] sm:$0xf]
      %v1286 = vld [vmem:[%s9 + $0x10] sm:$0xf]
      %v1287 = vld [vmem:[%s9 + $0x14] sm:$0xf]
      %v1288 = vld [vmem:[%s9 + $0x18] sm:$0xf]
      %v1289 = vld [vmem:[%s9 + $0x1c] sm:$0xf]
      %v1290 = vld [vmem:[%s9 + $0x20] sm:$0xf]
      %v1291 = vld [vmem:[%s9 + $0x24] sm:$0xf]
      %v1292 = vld [vmem:[%s9 + $0x28] sm:$0xf]
      %v1293 = vld [vmem:[%s9 + $0x2c] sm:$0xf]
      %v1294 = vld [vmem:[%s9 + $0x30] sm:$0xf]
      %v1295 = vld [vmem:[%s9 + $0x34] sm:$0xf]
      %v1296 = vld [vmem:[%s9 + $0x38] sm:$0xf]
      %v1297 = vld [vmem:[%s9 + $0x3c] sm:$0xf]
      %v1298 = vld [vmem:[%s10] sm:$0x1]
      %v1300 = vperm.slane %v1298, 0
      %v1318 = vunpack.c.l.b16 %v1282
      %v1319 = vunpack.c.l.b16 %v1283
      %v1320 = vunpack.c.l.b16 %v1284
      %v1321 = vunpack.c.l.b16 %v1285
      %v1322 = vunpack.c.l.b16 %v1286
      %v1323 = vunpack.c.l.b16 %v1287
      %v1324 = vunpack.c.l.b16 %v1288
      %v1325 = vunpack.c.l.b16 %v1289
      %v1326 = vunpack.c.l.b16 %v1290
      %v1327 = vunpack.c.l.b16 %v1291
      %v1328 = vunpack.c.l.b16 %v1292
      %v1329 = vunpack.c.l.b16 %v1293
      %v1330 = vunpack.c.l.b16 %v1294
      %v1331 = vunpack.c.l.b16 %v1295
      %v1332 = vunpack.c.l.b16 %v1296
      %v1333 = vunpack.c.l.b16 %v1297
      %v1334 = vpack.c.b16 %v1319, %v1318
      %v1335 = vpack.c.b16 %v1321, %v1320
      %v1336 = vpack.c.b16 %v1323, %v1322
      %v1337 = vpack.c.b16 %v1325, %v1324
      %v1338 = vpack.c.b16 %v1327, %v1326
      %v1339 = vpack.c.b16 %v1329, %v1328
      %v1340 = vpack.c.b16 %v1331, %v1330
      %v1341 = vpack.c.b16 %v1333, %v1332
      %1350 = vmatpush.bf16.msra.mxu0 %v1341
      %1351 = vmatpush.bf16.msra.mxu0 %v1340
      %1352 = vmatpush.bf16.msra.mxu0 %v1339
      %1353 = vmatpush.bf16.msra.mxu0 %v1338
      %1354 = vmatpush.bf16.msra.mxu0 %v1337
      %1355 = vmatpush.bf16.msra.mxu0 %v1336
      %1356 = vmatpush.bf16.msra.mxu0 %v1335
      %1357 = vmatpush.bf16.msra.mxu0 %v1334
      %1358 = vmatmul.bf16.gmra.mxu0 %v1274
      %v1359 = vpop.f32.mrf.mxu0
      %v1360 = vadd.f32 %v1300, %v1359
      %v1361 = vpop.f32.mrf.mxu0
      %v1362 = vadd.f32 %v1300, %v1361
      %1363 = vmatmul.bf16.gmra.mxu0 %v1275
      %v1364 = vpop.f32.mrf.mxu0
      %v1365 = vadd.f32 %v1300, %v1364
      %v1366 = vpop.f32.mrf.mxu0
      %v1367 = vadd.f32 %v1300, %v1366
      %1368 = vmatmul.bf16.gmra.mxu0 %v1276
      %v1369 = vpop.f32.mrf.mxu0
      %v1370 = vadd.f32 %v1300, %v1369
      %v1371 = vpop.f32.mrf.mxu0
      %v1372 = vadd.f32 %v1300, %v1371
      %1373 = vmatmul.bf16.gmra.mxu0 %v1277
      %v1374 = vpop.f32.mrf.mxu0
      %v1375 = vadd.f32 %v1300, %v1374
      %v1376 = vpop.f32.mrf.mxu0
      %v1377 = vadd.f32 %v1300, %v1376
      %1378 = vmatmul.bf16.gmra.mxu0 %v1278
      %v1379 = vpop.f32.mrf.mxu0
      %v1380 = vadd.f32 %v1300, %v1379
      %v1381 = vpop.f32.mrf.mxu0
      %v1382 = vadd.f32 %v1300, %v1381
      %1383 = vmatmul.bf16.gmra.mxu0 %v1279
      %v1384 = vpop.f32.mrf.mxu0
      %v1385 = vadd.f32 %v1300, %v1384
      %v1386 = vpop.f32.mrf.mxu0
      %v1387 = vadd.f32 %v1300, %v1386
      %1388 = vmatmul.bf16.gmra.mxu0 %v1280
      %v1389 = vpop.f32.mrf.mxu0
      %v1390 = vadd.f32 %v1300, %v1389
      %v1391 = vpop.f32.mrf.mxu0
      %v1392 = vadd.f32 %v1300, %v1391
      %1393 = vmatmul.bf16.gmra.mxu0 %v1281
      %v1394 = vpop.f32.mrf.mxu0
      %v1395 = vadd.f32 %v1300, %v1394
      %v1396 = vpop.f32.mrf.mxu0
      %v1397 = vadd.f32 %v1300, %v1396
      %1398 = vdwg.mxu0
      %1399 = vadd.xlane.f32.xlu0 %v1360
      %v1400 = vpop.xlane.xlu0 %1399
      %1401 = vadd.xlane.f32.xlu0 %v1362
      %v1402 = vpop.xlane.xlu0 %1401
      %1403 = vadd.xlane.f32.xlu0 %v1365
      %v1404 = vpop.xlane.xlu0 %1403
      %1405 = vadd.xlane.f32.xlu0 %v1367
      %v1406 = vpop.xlane.xlu0 %1405
      %1407 = vadd.xlane.f32.xlu0 %v1370
      %v1408 = vpop.xlane.xlu0 %1407
      %1409 = vadd.xlane.f32.xlu0 %v1372
      %v1410 = vpop.xlane.xlu0 %1409
      %1411 = vadd.xlane.f32.xlu0 %v1375
      %v1412 = vpop.xlane.xlu0 %1411
      %1413 = vadd.xlane.f32.xlu0 %v1377
      %v1414 = vpop.xlane.xlu0 %1413
      %1415 = vadd.xlane.f32.xlu0 %v1380
      %v1416 = vpop.xlane.xlu0 %1415
      %1417 = vadd.xlane.f32.xlu0 %v1382
      %v1418 = vpop.xlane.xlu0 %1417
      %1419 = vadd.xlane.f32.xlu0 %v1385
      %v1420 = vpop.xlane.xlu0 %1419
      %1421 = vadd.xlane.f32.xlu0 %v1387
      %v1422 = vpop.xlane.xlu0 %1421
      %1423 = vadd.xlane.f32.xlu0 %v1390
      %v1424 = vpop.xlane.xlu0 %1423
      %1425 = vadd.xlane.f32.xlu0 %v1392
      %v1426 = vpop.xlane.xlu0 %1425
      %1427 = vadd.xlane.f32.xlu0 %v1395
      %v1428 = vpop.xlane.xlu0 %1427
      %1429 = vadd.xlane.f32.xlu0 %v1397
      %v1430 = vpop.xlane.xlu0 %1429
      %v1431 = vmul.f32 %v1400, %v929
      %v1432 = vmul.f32 %v1402, %v929
      %v1433 = vmul.f32 %v1404, %v929
      %v1434 = vmul.f32 %v1406, %v929
      %v1435 = vmul.f32 %v1408, %v929
      %v1436 = vmul.f32 %v1410, %v929
      %v1437 = vmul.f32 %v1412, %v929
      %v1438 = vmul.f32 %v1414, %v929
      %v1439 = vmul.f32 %v1416, %v929
      %v1440 = vmul.f32 %v1418, %v929
      %v1441 = vmul.f32 %v1420, %v929
      %v1442 = vmul.f32 %v1422, %v929
      %v1443 = vmul.f32 %v1424, %v929
      %v1444 = vmul.f32 %v1426, %v929
      %v1445 = vmul.f32 %v1428, %v929
      %v1446 = vmul.f32 %v1430, %v929
      %v1447 = vsub.f32 %v1360, %v1431
      %v1448 = vsub.f32 %v1362, %v1432
      %v1449 = vsub.f32 %v1365, %v1433
      %v1450 = vsub.f32 %v1367, %v1434
      %v1451 = vsub.f32 %v1370, %v1435
      %v1452 = vsub.f32 %v1372, %v1436
      %v1453 = vsub.f32 %v1375, %v1437
      %v1454 = vsub.f32 %v1377, %v1438
      %v1455 = vsub.f32 %v1380, %v1439
      %v1456 = vsub.f32 %v1382, %v1440
      %v1457 = vsub.f32 %v1385, %v1441
      %v1458 = vsub.f32 %v1387, %v1442
      %v1459 = vsub.f32 %v1390, %v1443
      %v1460 = vsub.f32 %v1392, %v1444
      %v1461 = vsub.f32 %v1395, %v1445
      %v1462 = vsub.f32 %v1397, %v1446
      %v1463 = vmul.f32 %v1447, %v1447
      %v1464 = vmul.f32 %v1448, %v1448
      %v1465 = vmul.f32 %v1449, %v1449
      %v1466 = vmul.f32 %v1450, %v1450
      %v1467 = vmul.f32 %v1451, %v1451
      %v1468 = vmul.f32 %v1452, %v1452
      %v1469 = vmul.f32 %v1453, %v1453
      %v1470 = vmul.f32 %v1454, %v1454
      %v1471 = vmul.f32 %v1455, %v1455
      %v1472 = vmul.f32 %v1456, %v1456
      %v1473 = vmul.f32 %v1457, %v1457
      %v1474 = vmul.f32 %v1458, %v1458
      %v1475 = vmul.f32 %v1459, %v1459
      %v1476 = vmul.f32 %v1460, %v1460
      %v1477 = vmul.f32 %v1461, %v1461
      %v1478 = vmul.f32 %v1462, %v1462
      %1479 = vadd.xlane.f32.xlu0 %v1463
      %v1480 = vpop.xlane.xlu0 %1479
      %1481 = vadd.xlane.f32.xlu0 %v1464
      %v1482 = vpop.xlane.xlu0 %1481
      %1483 = vadd.xlane.f32.xlu0 %v1465
      %v1484 = vpop.xlane.xlu0 %1483
      %1485 = vadd.xlane.f32.xlu0 %v1466
      %v1486 = vpop.xlane.xlu0 %1485
      %1487 = vadd.xlane.f32.xlu0 %v1467
      %v1488 = vpop.xlane.xlu0 %1487
      %1489 = vadd.xlane.f32.xlu0 %v1468
      %v1490 = vpop.xlane.xlu0 %1489
      %1491 = vadd.xlane.f32.xlu0 %v1469
      %v1492 = vpop.xlane.xlu0 %1491
      %1493 = vadd.xlane.f32.xlu0 %v1470
      %v1494 = vpop.xlane.xlu0 %1493
      %1495 = vadd.xlane.f32.xlu0 %v1471
      %v1496 = vpop.xlane.xlu0 %1495
      %1497 = vadd.xlane.f32.xlu0 %v1472
      %v1498 = vpop.xlane.xlu0 %1497
      %1499 = vadd.xlane.f32.xlu0 %v1473
      %v1500 = vpop.xlane.xlu0 %1499
      %1501 = vadd.xlane.f32.xlu0 %v1474
      %v1502 = vpop.xlane.xlu0 %1501
      %1503 = vadd.xlane.f32.xlu0 %v1475
      %v1504 = vpop.xlane.xlu0 %1503
      %1505 = vadd.xlane.f32.xlu0 %v1476
      %v1506 = vpop.xlane.xlu0 %1505
      %1507 = vadd.xlane.f32.xlu0 %v1477
      %v1508 = vpop.xlane.xlu0 %1507
      %1509 = vadd.xlane.f32.xlu0 %v1478
      %v1510 = vpop.xlane.xlu0 %1509
      %v1511 = vmul.f32 %v1480, %v929
      %v1512 = vmul.f32 %v1482, %v929
      %v1513 = vmul.f32 %v1484, %v929
      %v1514 = vmul.f32 %v1486, %v929
      %v1515 = vmul.f32 %v1488, %v929
      %v1516 = vmul.f32 %v1490, %v929
      %v1517 = vmul.f32 %v1492, %v929
      %v1518 = vmul.f32 %v1494, %v929
      %v1519 = vmul.f32 %v1496, %v929
      %v1520 = vmul.f32 %v1498, %v929
      %v1521 = vmul.f32 %v1500, %v929
      %v1522 = vmul.f32 %v1502, %v929
      %v1523 = vmul.f32 %v1504, %v929
      %v1524 = vmul.f32 %v1506, %v929
      %v1525 = vmul.f32 %v1508, %v929
      %v1526 = vmul.f32 %v1510, %v929
      %v1527 = vadd.f32 %v1511, 1e-05
      %v1528 = vadd.f32 %v1512, 1e-05
      %v1529 = vadd.f32 %v1513, 1e-05
      %v1530 = vadd.f32 %v1514, 1e-05
      %v1531 = vadd.f32 %v1515, 1e-05
      %v1532 = vadd.f32 %v1516, 1e-05
      %v1533 = vadd.f32 %v1517, 1e-05
      %v1534 = vadd.f32 %v1518, 1e-05
      %v1535 = vadd.f32 %v1519, 1e-05
      %v1536 = vadd.f32 %v1520, 1e-05
      %v1537 = vadd.f32 %v1521, 1e-05
      %v1538 = vadd.f32 %v1522, 1e-05
      %v1539 = vadd.f32 %v1523, 1e-05
      %v1540 = vadd.f32 %v1524, 1e-05
      %v1541 = vadd.f32 %v1525, 1e-05
      %v1542 = vadd.f32 %v1526, 1e-05
      %v1543 = vrsqrt.pop %v1527
      %v1544 = vmul.f32 %v1543, %v1527
      %v1545 = vmul.f32 %v1544, %v1543
      %v1546 = vmul.f32 0.5, %v1545
      %v1547 = vsub.f32 1.5, %v1546
      %v1548 = vmul.f32 %v1543, %v1547
      %vm1549 = vweird.f32 %v1527
      %vm1550 = vweird.f32 %v1543
      %vm1551 = vmor %vm1549, %vm1550
      %v1552 = vsel %vm1551, %v1543, %v1548
      %v1553 = vrsqrt.pop %v1528
      %v1554 = vmul.f32 %v1553, %v1528
      %v1555 = vmul.f32 %v1554, %v1553
      %v1556 = vmul.f32 0.5, %v1555
      %v1557 = vsub.f32 1.5, %v1556
      %v1558 = vmul.f32 %v1553, %v1557
      %vm1559 = vweird.f32 %v1528
      %vm1560 = vweird.f32 %v1553
      %vm1561 = vmor %vm1559, %vm1560
      %v1562 = vsel %vm1561, %v1553, %v1558
      %v1563 = vrsqrt.pop %v1529
      %v1564 = vmul.f32 %v1563, %v1529
      %v1565 = vmul.f32 %v1564, %v1563
      %v1566 = vmul.f32 0.5, %v1565
      %v1567 = vsub.f32 1.5, %v1566
      %v1568 = vmul.f32 %v1563, %v1567
      %vm1569 = vweird.f32 %v1529
      %vm1570 = vweird.f32 %v1563
      %vm1571 = vmor %vm1569, %vm1570
      %v1572 = vsel %vm1571, %v1563, %v1568
      %v1573 = vrsqrt.pop %v1530
      %v1574 = vmul.f32 %v1573, %v1530
      %v1575 = vmul.f32 %v1574, %v1573
      %v1576 = vmul.f32 0.5, %v1575
      %v1577 = vsub.f32 1.5, %v1576
      %v1578 = vmul.f32 %v1573, %v1577
      %vm1579 = vweird.f32 %v1530
      %vm1580 = vweird.f32 %v1573
      %vm1581 = vmor %vm1579, %vm1580
      %v1582 = vsel %vm1581, %v1573, %v1578
      %v1583 = vrsqrt.pop %v1531
      %v1584 = vmul.f32 %v1583, %v1531
      %v1585 = vmul.f32 %v1584, %v1583
      %v1586 = vmul.f32 0.5, %v1585
      %v1587 = vsub.f32 1.5, %v1586
      %v1588 = vmul.f32 %v1583, %v1587
      %vm1589 = vweird.f32 %v1531
      %vm1590 = vweird.f32 %v1583
      %vm1591 = vmor %vm1589, %vm1590
      %v1592 = vsel %vm1591, %v1583, %v1588
      %v1593 = vrsqrt.pop %v1532
      %v1594 = vmul.f32 %v1593, %v1532
      %v1595 = vmul.f32 %v1594, %v1593
      %v1596 = vmul.f32 0.5, %v1595
      %v1597 = vsub.f32 1.5, %v1596
      %v1598 = vmul.f32 %v1593, %v1597
      %vm1599 = vweird.f32 %v1532
      %vm1600 = vweird.f32 %v1593
      %vm1601 = vmor %vm1599, %vm1600
      %v1602 = vsel %vm1601, %v1593, %v1598
      %v1603 = vrsqrt.pop %v1533
      %v1604 = vmul.f32 %v1603, %v1533
      %v1605 = vmul.f32 %v1604, %v1603
      %v1606 = vmul.f32 0.5, %v1605
      %v1607 = vsub.f32 1.5, %v1606
      %v1608 = vmul.f32 %v1603, %v1607
      %vm1609 = vweird.f32 %v1533
      %vm1610 = vweird.f32 %v1603
      %vm1611 = vmor %vm1609, %vm1610
      %v1612 = vsel %vm1611, %v1603, %v1608
      %v1613 = vrsqrt.pop %v1534
      %v1614 = vmul.f32 %v1613, %v1534
      %v1615 = vmul.f32 %v1614, %v1613
      %v1616 = vmul.f32 0.5, %v1615
      %v1617 = vsub.f32 1.5, %v1616
      %v1618 = vmul.f32 %v1613, %v1617
      %vm1619 = vweird.f32 %v1534
      %vm1620 = vweird.f32 %v1613
      %vm1621 = vmor %vm1619, %vm1620
      %v1622 = vsel %vm1621, %v1613, %v1618
      %v1623 = vrsqrt.pop %v1535
      %v1624 = vmul.f32 %v1623, %v1535
      %v1625 = vmul.f32 %v1624, %v1623
      %v1626 = vmul.f32 0.5, %v1625
      %v1627 = vsub.f32 1.5, %v1626
      %v1628 = vmul.f32 %v1623, %v1627
      %vm1629 = vweird.f32 %v1535
      %vm1630 = vweird.f32 %v1623
      %vm1631 = vmor %vm1629, %vm1630
      %v1632 = vsel %vm1631, %v1623, %v1628
      %v1633 = vrsqrt.pop %v1536
      %v1634 = vmul.f32 %v1633, %v1536
      %v1635 = vmul.f32 %v1634, %v1633
      %v1636 = vmul.f32 0.5, %v1635
      %v1637 = vsub.f32 1.5, %v1636
      %v1638 = vmul.f32 %v1633, %v1637
      %vm1639 = vweird.f32 %v1536
      %vm1640 = vweird.f32 %v1633
      %vm1641 = vmor %vm1639, %vm1640
      %v1642 = vsel %vm1641, %v1633, %v1638
      %v1643 = vrsqrt.pop %v1537
      %v1644 = vmul.f32 %v1643, %v1537
      %v1645 = vmul.f32 %v1644, %v1643
      %v1646 = vmul.f32 0.5, %v1645
      %v1647 = vsub.f32 1.5, %v1646
      %v1648 = vmul.f32 %v1643, %v1647
      %vm1649 = vweird.f32 %v1537
      %vm1650 = vweird.f32 %v1643
      %vm1651 = vmor %vm1649, %vm1650
      %v1652 = vsel %vm1651, %v1643, %v1648
      %v1653 = vrsqrt.pop %v1538
      %v1654 = vmul.f32 %v1653, %v1538
      %v1655 = vmul.f32 %v1654, %v1653
      %v1656 = vmul.f32 0.5, %v1655
      %v1657 = vsub.f32 1.5, %v1656
      %v1658 = vmul.f32 %v1653, %v1657
      %vm1659 = vweird.f32 %v1538
      %vm1660 = vweird.f32 %v1653
      %vm1661 = vmor %vm1659, %vm1660
      %v1662 = vsel %vm1661, %v1653, %v1658
      %v1663 = vrsqrt.pop %v1539
      %v1664 = vmul.f32 %v1663, %v1539
      %v1665 = vmul.f32 %v1664, %v1663
      %v1666 = vmul.f32 0.5, %v1665
      %v1667 = vsub.f32 1.5, %v1666
      %v1668 = vmul.f32 %v1663, %v1667
      %vm1669 = vweird.f32 %v1539
      %vm1670 = vweird.f32 %v1663
      %vm1671 = vmor %vm1669, %vm1670
      %v1672 = vsel %vm1671, %v1663, %v1668
      %v1673 = vrsqrt.pop %v1540
      %v1674 = vmul.f32 %v1673, %v1540
      %v1675 = vmul.f32 %v1674, %v1673
      %v1676 = vmul.f32 0.5, %v1675
      %v1677 = vsub.f32 1.5, %v1676
      %v1678 = vmul.f32 %v1673, %v1677
      %vm1679 = vweird.f32 %v1540
      %vm1680 = vweird.f32 %v1673
      %vm1681 = vmor %vm1679, %vm1680
      %v1682 = vsel %vm1681, %v1673, %v1678
      %v1683 = vrsqrt.pop %v1541
      %v1684 = vmul.f32 %v1683, %v1541
      %v1685 = vmul.f32 %v1684, %v1683
      %v1686 = vmul.f32 0.5, %v1685
      %v1687 = vsub.f32 1.5, %v1686
      %v1688 = vmul.f32 %v1683, %v1687
      %vm1689 = vweird.f32 %v1541
      %vm1690 = vweird.f32 %v1683
      %vm1691 = vmor %vm1689, %vm1690
      %v1692 = vsel %vm1691, %v1683, %v1688
      %v1693 = vrsqrt.pop %v1542
      %v1694 = vmul.f32 %v1693, %v1542
      %v1695 = vmul.f32 %v1694, %v1693
      %v1696 = vmul.f32 0.5, %v1695
      %v1697 = vsub.f32 1.5, %v1696
      %v1698 = vmul.f32 %v1693, %v1697
      %vm1699 = vweird.f32 %v1542
      %vm1700 = vweird.f32 %v1693
      %vm1701 = vmor %vm1699, %vm1700
      %v1702 = vsel %vm1701, %v1693, %v1698
      %v1703 = vmul.f32 %v1447, %v1552
      %v1704 = vmul.f32 %v1448, %v1562
      %v1705 = vmul.f32 %v1449, %v1572
      %v1706 = vmul.f32 %v1450, %v1582
      %v1707 = vmul.f32 %v1451, %v1592
      %v1708 = vmul.f32 %v1452, %v1602
      %v1709 = vmul.f32 %v1453, %v1612
      %v1710 = vmul.f32 %v1454, %v1622
      %v1711 = vmul.f32 %v1455, %v1632
      %v1712 = vmul.f32 %v1456, %v1642
      %v1713 = vmul.f32 %v1457, %v1652
      %v1714 = vmul.f32 %v1458, %v1662
      %v1715 = vmul.f32 %v1459, %v1672
      %v1716 = vmul.f32 %v1460, %v1682
      %v1717 = vmul.f32 %v1461, %v1692
      %v1718 = vmul.f32 %v1462, %v1702
      %v1719 = vld [vmem:[%s11] sm:$0x1]
      %v1721 = vperm.slane %v1719, 0
      %v1723 = vmul.f32 %v1703, %v1721
      %v1724 = vmul.f32 %v1704, %v1721
      %v1725 = vmul.f32 %v1705, %v1721
      %v1726 = vmul.f32 %v1706, %v1721
      %v1727 = vmul.f32 %v1707, %v1721
      %v1728 = vmul.f32 %v1708, %v1721
      %v1729 = vmul.f32 %v1709, %v1721
      %v1730 = vmul.f32 %v1710, %v1721
      %v1731 = vmul.f32 %v1711, %v1721
      %v1732 = vmul.f32 %v1712, %v1721
      %v1733 = vmul.f32 %v1713, %v1721
      %v1734 = vmul.f32 %v1714, %v1721
      %v1735 = vmul.f32 %v1715, %v1721
      %v1736 = vmul.f32 %v1716, %v1721
      %v1737 = vmul.f32 %v1717, %v1721
      %v1738 = vmul.f32 %v1718, %v1721
      %v1739 = vld [vmem:[%s12] sm:$0x1]
      %v1741 = vperm.slane %v1739, 0
      %v1743 = vadd.f32 %v1723, %v1741
      %v1744 = vadd.f32 %v1724, %v1741
      %v1745 = vadd.f32 %v1725, %v1741
      %v1746 = vadd.f32 %v1726, %v1741
      %v1747 = vadd.f32 %v1727, %v1741
      %v1748 = vadd.f32 %v1728, %v1741
      %v1749 = vadd.f32 %v1729, %v1741
      %v1750 = vadd.f32 %v1730, %v1741
      %v1751 = vadd.f32 %v1731, %v1741
      %v1752 = vadd.f32 %v1732, %v1741
      %v1753 = vadd.f32 %v1733, %v1741
      %v1754 = vadd.f32 %v1734, %v1741
      %v1755 = vadd.f32 %v1735, %v1741
      %v1756 = vadd.f32 %v1736, %v1741
      %v1757 = vadd.f32 %v1737, %v1741
      %v1758 = vadd.f32 %v1738, %v1741
      %v1759 = vmax.f32 %v1743, 0.0
      %v1760 = vmax.f32 %v1744, 0.0
      %v1761 = vmax.f32 %v1745, 0.0
      %v1762 = vmax.f32 %v1746, 0.0
      %v1763 = vmax.f32 %v1747, 0.0
      %v1764 = vmax.f32 %v1748, 0.0
      %v1765 = vmax.f32 %v1749, 0.0
      %v1766 = vmax.f32 %v1750, 0.0
      %v1767 = vmax.f32 %v1751, 0.0
      %v1768 = vmax.f32 %v1752, 0.0
      %v1769 = vmax.f32 %v1753, 0.0
      %v1770 = vmax.f32 %v1754, 0.0
      %v1771 = vmax.f32 %v1755, 0.0
      %v1772 = vmax.f32 %v1756, 0.0
      %v1773 = vmax.f32 %v1757, 0.0
      %v1774 = vmax.f32 %v1758, 0.0
      %v1775 = vpack.c.bf16 %v1760, %v1759
      %v1776 = vpack.c.bf16 %v1762, %v1761
      %v1777 = vpack.c.bf16 %v1764, %v1763
      %v1778 = vpack.c.bf16 %v1766, %v1765
      %v1779 = vpack.c.bf16 %v1768, %v1767
      %v1780 = vpack.c.bf16 %v1770, %v1769
      %v1781 = vpack.c.bf16 %v1772, %v1771
      %v1782 = vpack.c.bf16 %v1774, %v1773
      %v1783 = vld [vmem:[%s13] sm:$0xf]
      %v1784 = vld [vmem:[%s13 + $0x4] sm:$0xf]
      %v1785 = vld [vmem:[%s13 + $0x8] sm:$0xf]
      %v1786 = vld [vmem:[%s13 + $0xc] sm:$0xf]
      %v1787 = vld [vmem:[%s13 + $0x10] sm:$0xf]
      %v1788 = vld [vmem:[%s13 + $0x14] sm:$0xf]
      %v1789 = vld [vmem:[%s13 + $0x18] sm:$0xf]
      %v1790 = vld [vmem:[%s13 + $0x1c] sm:$0xf]
      %v1791 = vld [vmem:[%s13 + $0x20] sm:$0xf]
      %v1792 = vld [vmem:[%s13 + $0x24] sm:$0xf]
      %v1793 = vld [vmem:[%s13 + $0x28] sm:$0xf]
      %v1794 = vld [vmem:[%s13 + $0x2c] sm:$0xf]
      %v1795 = vld [vmem:[%s13 + $0x30] sm:$0xf]
      %v1796 = vld [vmem:[%s13 + $0x34] sm:$0xf]
      %v1797 = vld [vmem:[%s13 + $0x38] sm:$0xf]
      %v1798 = vld [vmem:[%s13 + $0x3c] sm:$0xf]
      %v1799 = vld [vmem:[%s14] sm:$0x1]
      %v1801 = vperm.slane %v1799, 0
      %v1819 = vunpack.c.l.b16 %v1783
      %v1820 = vunpack.c.l.b16 %v1784
      %v1821 = vunpack.c.l.b16 %v1785
      %v1822 = vunpack.c.l.b16 %v1786
      %v1823 = vunpack.c.l.b16 %v1787
      %v1824 = vunpack.c.l.b16 %v1788
      %v1825 = vunpack.c.l.b16 %v1789
      %v1826 = vunpack.c.l.b16 %v1790
      %v1827 = vunpack.c.l.b16 %v1791
      %v1828 = vunpack.c.l.b16 %v1792
      %v1829 = vunpack.c.l.b16 %v1793
      %v1830 = vunpack.c.l.b16 %v1794
      %v1831 = vunpack.c.l.b16 %v1795
      %v1832 = vunpack.c.l.b16 %v1796
      %v1833 = vunpack.c.l.b16 %v1797
      %v1834 = vunpack.c.l.b16 %v1798
      %v1835 = vpack.c.b16 %v1820, %v1819
      %v1836 = vpack.c.b16 %v1822, %v1821
      %v1837 = vpack.c.b16 %v1824, %v1823
      %v1838 = vpack.c.b16 %v1826, %v1825
      %v1839 = vpack.c.b16 %v1828, %v1827
      %v1840 = vpack.c.b16 %v1830, %v1829
      %v1841 = vpack.c.b16 %v1832, %v1831
      %v1842 = vpack.c.b16 %v1834, %v1833
      %1851 = vmatpush.bf16.msra.mxu0 %v1842
      %1852 = vmatpush.bf16.msra.mxu0 %v1841
      %1853 = vmatpush.bf16.msra.mxu0 %v1840
      %1854 = vmatpush.bf16.msra.mxu0 %v1839
      %1855 = vmatpush.bf16.msra.mxu0 %v1838
      %1856 = vmatpush.bf16.msra.mxu0 %v1837
      %1857 = vmatpush.bf16.msra.mxu0 %v1836
      %1858 = vmatpush.bf16.msra.mxu0 %v1835
      %1859 = vmatmul.bf16.gmra.mxu0 %v1775
      %v1860 = vpop.f32.mrf.mxu0
      %v1861 = vadd.f32 %v1801, %v1860
      %v1862 = vpop.f32.mrf.mxu0
      %v1863 = vadd.f32 %v1801, %v1862
      %1864 = vmatmul.bf16.gmra.mxu0 %v1776
      %v1865 = vpop.f32.mrf.mxu0
      %v1866 = vadd.f32 %v1801, %v1865
      %v1867 = vpop.f32.mrf.mxu0
      %v1868 = vadd.f32 %v1801, %v1867
      %1869 = vmatmul.bf16.gmra.mxu0 %v1777
      %v1870 = vpop.f32.mrf.mxu0
      %v1871 = vadd.f32 %v1801, %v1870
      %v1872 = vpop.f32.mrf.mxu0
      %v1873 = vadd.f32 %v1801, %v1872
      %1874 = vmatmul.bf16.gmra.mxu0 %v1778
      %v1875 = vpop.f32.mrf.mxu0
      %v1876 = vadd.f32 %v1801, %v1875
      %v1877 = vpop.f32.mrf.mxu0
      %v1878 = vadd.f32 %v1801, %v1877
      %1879 = vmatmul.bf16.gmra.mxu0 %v1779
      %v1880 = vpop.f32.mrf.mxu0
      %v1881 = vadd.f32 %v1801, %v1880
      %v1882 = vpop.f32.mrf.mxu0
      %v1883 = vadd.f32 %v1801, %v1882
      %1884 = vmatmul.bf16.gmra.mxu0 %v1780
      %v1885 = vpop.f32.mrf.mxu0
      %v1886 = vadd.f32 %v1801, %v1885
      %v1887 = vpop.f32.mrf.mxu0
      %v1888 = vadd.f32 %v1801, %v1887
      %1889 = vmatmul.bf16.gmra.mxu0 %v1781
      %v1890 = vpop.f32.mrf.mxu0
      %v1891 = vadd.f32 %v1801, %v1890
      %v1892 = vpop.f32.mrf.mxu0
      %v1893 = vadd.f32 %v1801, %v1892
      %1894 = vmatmul.bf16.gmra.mxu0 %v1782
      %v1895 = vpop.f32.mrf.mxu0
      %v1896 = vadd.f32 %v1801, %v1895
      %v1897 = vpop.f32.mrf.mxu0
      %v1898 = vadd.f32 %v1801, %v1897
      %1899 = vdwg.mxu0
      %v1900 = vpack.c.bf16 %v1861, %v1861
      %v1901 = vpack.c.bf16 %v1863, %v1863
      %v1902 = vpack.c.bf16 %v1866, %v1866
      %v1903 = vpack.c.bf16 %v1868, %v1868
      %v1904 = vpack.c.bf16 %v1871, %v1871
      %v1905 = vpack.c.bf16 %v1873, %v1873
      %v1906 = vpack.c.bf16 %v1876, %v1876
      %v1907 = vpack.c.bf16 %v1878, %v1878
      %v1908 = vpack.c.bf16 %v1881, %v1881
      %v1909 = vpack.c.bf16 %v1883, %v1883
      %v1910 = vpack.c.bf16 %v1886, %v1886
      %v1911 = vpack.c.bf16 %v1888, %v1888
      %v1912 = vpack.c.bf16 %v1891, %v1891
      %v1913 = vpack.c.bf16 %v1893, %v1893
      %v1914 = vpack.c.bf16 %v1896, %v1896
      %v1915 = vpack.c.bf16 %v1898, %v1898
      %1916 = vst [vmem:[%s518] sm:$0xf] %v1900
      %1917 = vst [vmem:[%s518 + $0x4] sm:$0xf] %v1901
      %1918 = vst [vmem:[%s518 + $0x8] sm:$0xf] %v1902
      %1919 = vst [vmem:[%s518 + $0xc] sm:$0xf] %v1903
      %1920 = vst [vmem:[%s518 + $0x10] sm:$0xf] %v1904
      %1921 = vst [vmem:[%s518 + $0x14] sm:$0xf] %v1905
      %1922 = vst [vmem:[%s518 + $0x18] sm:$0xf] %v1906
      %1923 = vst [vmem:[%s518 + $0x1c] sm:$0xf] %v1907
      %1924 = vst [vmem:[%s518 + $0x20] sm:$0xf] %v1908
      %1925 = vst [vmem:[%s518 + $0x24] sm:$0xf] %v1909
      %1926 = vst [vmem:[%s518 + $0x28] sm:$0xf] %v1910
      %1927 = vst [vmem:[%s518 + $0x2c] sm:$0xf] %v1911
      %1928 = vst [vmem:[%s518 + $0x30] sm:$0xf] %v1912
      %1929 = vst [vmem:[%s518 + $0x34] sm:$0xf] %v1913
      %1930 = vst [vmem:[%s518 + $0x38] sm:$0xf] %v1914
      %1931 = vst [vmem:[%s518 + $0x3c] sm:$0xf] %v1915
      %s1932 = smul.u32 16, %s26
      %p1933 = scmp.lt.s32.totalorder %s1932, 31
      %s1934 = scalar_select %p1933, %s1932, 31
      %s1935 = smul.addr %s1934, 4
      %s1936 = scalar_lea.vmem %s15, %s1935
      // Predicated region
      $region81: #{forward_model.1} parent=79 // pred_check
        %p1937 = pneg %p369
      $region82: #{forward_model.1} parent=79 // pred_check_branch
        %1939 = sbr.rel (%p1937) target = $region84
      $region83: #{forward_model.1} parent=79 // pred_region
        %s1940 = smul.u32 16, %s26
      $region84: #{forward_model.1} parent=79 // pred_fallthru
        _
    $region80: #{forward_model.1} parent=5 // pred_fallthru
      _
    %p1941 = scmp.le.s32.totalorder 2, %s21
    // Predicated region
    $region85: #{forward_model.1} parent=5 // pred_check
      %p1942 = pneg %p1941
    $region86: #{forward_model.1} parent=5 // pred_check_branch
      %1944 = sbr.rel (%p1942) target = $region88
    $region87: #{forward_model.1} parent=5 // pred_region
      %s1945 = ssub.s32 %s21, 2
      // Predicated region
      $region89: #{forward_model.1} parent=87 // pred_check
        %p1946 = pneg %p375
      $region90: #{forward_model.1} parent=87 // pred_check_branch
        %1948 = sbr.rel (%p1946) target = $region92
      $region91: #{forward_model.1} parent=87 // pred_region
        %s1949 = smul.u32 16, %s27
        %p1950 = scmp.lt.s32.totalorder %s1949, 31
        %s1951 = scalar_select %p1950, %s1949, 31
        %s1952 = smul.addr %s1951, 4
        %s1953 = scalar_lea.vmem %s15, %s1952
      $region92: #{forward_model.1} parent=87 // pred_fallthru
        _
    $region88: #{forward_model.1} parent=5 // pred_fallthru
      _
  $region6: #{forward_model.1} parent=0 // loop_footer
    %s25 = sadd.s32 1, %s21
  $region7: #{forward_model.1} parent=0 // loop_footer_branch
    %20 = sbr.rel target = $region3
  $region8: #{forward_model.1} parent=0 // loop_exit
    _

</llo_original>
